<compile_context>
chip_gen: v6e
topology: v6e:2x2x1
jax: 0.10.0
libtpu: 0.0.40
codegen_flags: <defaults>
</compile_context>

<pallas_src>
import functools

import numpy as np
import jax
import jax.numpy as jnp
from jax.experimental import pallas as pl
from jax.experimental.pallas import tpu as pltpu

SIGMA = 3
RADIUS = int(4 * SIGMA + 0.5)     # scipy gaussian_filter1d default truncate=4.0
AP_CUT = 15

VMEM = pl.BlockSpec(memory_space=pltpu.MemorySpace.VMEM)
SMEM = pl.BlockSpec(memory_space=pltpu.MemorySpace.SMEM)


# ----------------------------------------------------------------------------
# Filter taps and dense boundary-baked conv matrices (built host-side in numpy)
# ----------------------------------------------------------------------------
def _gaussian_weights(sigma, order, radius):
    x = np.arange(-radius, radius + 1, dtype=np.float64)
    phi = np.exp(-0.5 * x * x / (sigma * sigma))
    phi /= phi.sum()
    if order == 0:
        return phi
    w = x * phi
    # normalized so a unit ramp maps to slope +1 (matches scipy order=1 sign)
    return w / np.sum(x * w)


def _conv_matrix(w, L, mode):
    """Dense (L_in, L_out) matrix M with (f @ M)[xo] = sum_u w[u+R] f[bc(xo+u)],
    i.e. the 1-D correlation with the boundary condition baked in."""
    R = (len(w) - 1) // 2
    M = np.zeros((L, L), np.float64)
    for xo in range(L):
        for u in range(-R, R + 1):
            xi = xo + u
            if mode == "replicate":
                xi = min(max(xi, 0), L - 1)
            elif mode == "circular":
                xi %= L
            else:
                raise ValueError(mode)
            M[xi, xo] += w[u + R]
    return M


@functools.lru_cache(maxsize=None)
def _build_constants(ny, nx, dv_mode, ap_mode):
    w_d1 = _gaussian_weights(SIGMA, 1, RADIUS)    # EmbryoGradient taps
    w_sm = _gaussian_weights(SIGMA, 0, RADIUS)    # EmbryoSmoother taps

    # DV (Y) convs act from the left:  out = My @ f   ->  My = M(in,out).T
    myd = _conv_matrix(w_d1, ny, dv_mode).T
    mys = _conv_matrix(w_sm, ny, dv_mode).T
    # AP (X) convs act from the right: out = f @ Mx
    mxd = _conv_matrix(w_d1, nx, ap_mode)
    mxs = _conv_matrix(w_sm, nx, ap_mode)
    # postprocess(): zero AP poles BEFORE smoothing; zeroing input columns of f
    # == zeroing those rows of the X smoothing matrix (commutes with Y smooth).
    mxsc = mxs.copy()
    mxsc[:AP_CUT, :] = 0.0
    mxsc[nx - AP_CUT:, :] = 0.0

    # sym_vel: v0 <- 0.5*(v0 - flip_DV(v0)) ; v1 <- 0.5*(v1 + flip_DV(v1))
    P = np.zeros((ny, ny))
    P[np.arange(ny), ny - 1 - np.arange(ny)] = 1.0
    sym = np.stack([0.5 * (np.eye(ny) - P), 0.5 * (np.eye(ny) + P)], axis=0)

    f32 = lambda a: jnp.asarray(a, jnp.float32)
    return f32(myd), f32(mxd), f32(mys), f32(mxsc), f32(sym)


# ----------------------------------------------------------------------------
# Fused kernel: velocity + gradients + physics + postprocess
# ----------------------------------------------------------------------------
def _closed_loop_kernel(wv_ref, bv_ref, y_ref, myd_ref, mxd_ref, mys_ref,
                        mxsc_ref, sym_ref, out_ref, *, nc, ny, nx):
    f32 = jnp.float32

    def chan(k):                                  # k-th (ny, nx) state channel
        return y_ref[k * ny:(k + 1) * ny, :]

    m = [chan(0), chan(1), chan(2), chan(3)]      # m[i*2+j]
    s = chan(4)

    # ---- velocity: 1x1 channel-mix stand-in for v_model, + sym_vel ----------
    # TODO(synk): real v_model is a learned network of (t, y); deterministic
    # linear channel mix (ignores t) stands in for it.
    v = []
    for c in range(2):
        acc = wv_ref[nc * c + 0] * m[0] + bv_ref[c]
        acc = acc + wv_ref[nc * c + 1] * m[1]
        acc = acc + wv_ref[nc * c + 2] * m[2]
        acc = acc + wv_ref[nc * c + 3] * m[3]
        acc = acc + wv_ref[nc * c + 4] * s
        # sym_vel folded into a (ny, ny) matrix: 0.5*(I -/+ DV-flip)
        v.append(jnp.dot(sym_ref[c], acc, preferred_element_type=f32))

    # ---- Gaussian-derivative gradients (boundary baked into dense matrices) -
    myd = myd_ref[...]                            # (ny, ny)  d/dY, DV-circular
    mxd = mxd_ref[...]                            # (nx, nx)  d/dX, AP-replicate
    # d/dX of all 5 state channels: ONE batched MXU matmul (nc*ny, nx)@(nx, nx)
    yX = jnp.dot(y_ref[...], mxd, preferred_element_type=f32)
    dXm = [yX[k * ny:(k + 1) * ny, :] for k in range(4)]
    dXs = yX[4 * ny:5 * ny, :]
    dXv = [jnp.dot(v[c], mxd, preferred_element_type=f32) for c in range(2)]
    # d/dY per channel: small (ny,ny)@(ny,nx) matmuls
    dYm = [jnp.dot(myd, m[k], preferred_element_type=f32) for k in range(4)]
    dYs = jnp.dot(myd, s, preferred_element_type=f32)
    dYv = [jnp.dot(myd, v[c], preferred_element_type=f32) for c in range(2)]

    # ---- pointwise physics ---------------------------------------------------
    # sdot = -v . grad(s)
    sdot = -(v[0] * dYs + v[1] * dXs)

    # O is antisymmetric -> single vorticity field w = O_01; only tr(E) is used.
    w = -0.5 * (dXv[0] - dYv[1])
    trE = dYv[0] + dXv[1]
    trm = m[0] + m[3]

    coef = (-(0.066 - 0.061 * s)
            + (0.489 + 0.318 * s) * trE
            + (0.564 - 0.393 * s) * trm)
    c4 = (0.047 - 0.037 * s) * trm                # gamma_dv_: only (0,0) entry

    sum_off = m[1] + m[2]
    diff = m[3] - m[0]
    corot = [w * sum_off, w * diff, w * diff, -w * sum_off]   # (O m - m O)_ij

    # ---- mdot, then postprocess (AP cut + smoothing), staged through out_ref -
    mys = mys_ref[...]                            # (ny, ny) DV-circular Gaussian
    for k in range(4):
        lhs = v[0] * dYm[k] + v[1] * dXm[k] + corot[k]
        rhs = coef * m[k]
        if k == 0:
            rhs = rhs + c4
        out_ref[k * ny:(k + 1) * ny, :] = jnp.dot(
            mys, rhs - lhs, preferred_element_type=f32)
    out_ref[4 * ny:5 * ny, :] = jnp.dot(mys, sdot, preferred_element_type=f32)

    # AP (X) smoothing with the AP-pole cut baked into mxsc, batched over all
    # 5 output channels in one MXU matmul.
    out_ref[...] = jnp.dot(out_ref[...], mxsc_ref[...],
                           preferred_element_type=f32)


# ----------------------------------------------------------------------------
# ClosedFlyLoop.forward
# ----------------------------------------------------------------------------
@functools.partial(jax.jit, static_argnames=("dv_mode", "ap_mode"))
def closed_fly_loop_forward(t, y, W, b, dv_mode="circular", ap_mode="replicate"):
    """y: (5, Y, X) state = [m00, m01, m10, m11, s].  Returns ydot (5, Y, X)."""
    # TODO(synk): InputProcessor.transform/inverse_transform is an external
    # fitted object; identity channel split / concat is used here.
    # TODO(synk): CovariantEmbryoGradient needs geometry files from geo_dir;
    # the standard EmbryoGradient (plain Gaussian derivative) is used instead.
    del t
    nc, ny, nx = y.shape
    myd, mxd, mys, mxsc, sym = _build_constants(ny, nx, dv_mode, ap_mode)

    kernel = functools.partial(_closed_loop_kernel, nc=nc, ny=ny, nx=nx)
    out2d = pl.pallas_call(
        kernel,
        out_shape=jax.ShapeDtypeStruct((nc * ny, nx), jnp.float32),
        in_specs=[SMEM, SMEM] + [VMEM] * 6,
        out_specs=VMEM,
    )(
        W.astype(jnp.float32).reshape(-1),        # (2*nc,) SMEM
        b.astype(jnp.float32),                    # (2,)    SMEM
        y.astype(jnp.float32).reshape(nc * ny, nx),
        myd, mxd, mys, mxsc, sym,
    )
    # TODO(synk): for a batch of states (ODE stages / many embryos) add a
    # leading "parallel" grid axis to shard across v7x's two TensorCores.
    return out2d.reshape(nc, ny, nx)


if __name__ == "__main__":
    key = jax.random.PRNGKey(0)
    NC, Y, X = 5, 32, 64          # state channels, DV, AP
    k1, k2, k3 = jax.random.split(key, 3)
    y0 = 0.1 * jax.random.normal(k1, (NC, Y, X), dtype=jnp.float32)
    W_vel = 0.1 * jax.random.normal(k2, (2, NC), dtype=jnp.float32)
    b_vel = 0.01 * jax.random.normal(k3, (2,), dtype=jnp.float32)
    t0 = jnp.float32(0.0)

    ydot = closed_fly_loop_forward(t0, y0, W_vel, b_vel)
    ydot = jax.block_until_ready(ydot)

    assert ydot.shape == (NC, Y, X), ydot.shape
    assert bool(jnp.all(jnp.isfinite(ydot)))
    print("KERNEL_OK")
</pallas_src>

<mosaic_0001>
module attributes {stable_mosaic.version = 11 : i64} {
  func.func @_closed_loop_kernel(%arg0: memref<10xf32, #tpu.memory_space<smem>>, %arg1: memref<2xf32, #tpu.memory_space<smem>>, %arg2: memref<160x64xf32, #tpu.memory_space<vmem>>, %arg3: memref<32x32xf32, #tpu.memory_space<vmem>>, %arg4: memref<64x64xf32, #tpu.memory_space<vmem>>, %arg5: memref<32x32xf32, #tpu.memory_space<vmem>>, %arg6: memref<64x64xf32, #tpu.memory_space<vmem>>, %arg7: memref<2x32x32xf32, #tpu.memory_space<vmem>>, %arg8: memref<160x64xf32, #tpu.memory_space<vmem>>) attributes {dimension_semantics = [], scalar_prefetch = 0 : i64, scratch_operands = 0 : i64, tpu.core_type = #tpu.core_type<tc>} {
    %c0 = arith.constant 0 : index
    %c0_0 = arith.constant 0 : index
    %0 = vector.load %arg2[%c0, %c0_0] : memref<160x64xf32, #tpu.memory_space<vmem>>, vector<32x64xf32>
    %c32 = arith.constant 32 : index
    %c0_1 = arith.constant 0 : index
    %1 = vector.load %arg2[%c32, %c0_1] : memref<160x64xf32, #tpu.memory_space<vmem>>, vector<32x64xf32>
    %c64 = arith.constant 64 : index
    %c0_2 = arith.constant 0 : index
    %2 = vector.load %arg2[%c64, %c0_2] : memref<160x64xf32, #tpu.memory_space<vmem>>, vector<32x64xf32>
    %c96 = arith.constant 96 : index
    %c0_3 = arith.constant 0 : index
    %3 = vector.load %arg2[%c96, %c0_3] : memref<160x64xf32, #tpu.memory_space<vmem>>, vector<32x64xf32>
    %c128 = arith.constant 128 : index
    %c0_4 = arith.constant 0 : index
    %4 = vector.load %arg2[%c128, %c0_4] : memref<160x64xf32, #tpu.memory_space<vmem>>, vector<32x64xf32>
    %c0_5 = arith.constant 0 : index
    %5 = memref.load %arg0[%c0_5] : memref<10xf32, #tpu.memory_space<smem>>
    %6 = vector.broadcast %5 : f32 to vector<32x64xf32>
    %7 = arith.mulf %6, %0 : vector<32x64xf32>
    %c0_6 = arith.constant 0 : index
    %8 = memref.load %arg1[%c0_6] : memref<2xf32, #tpu.memory_space<smem>>
    %9 = vector.broadcast %8 : f32 to vector<32x64xf32>
    %10 = arith.addf %7, %9 : vector<32x64xf32>
    %c1 = arith.constant 1 : index
    %11 = memref.load %arg0[%c1] : memref<10xf32, #tpu.memory_space<smem>>
    %12 = vector.broadcast %11 : f32 to vector<32x64xf32>
    %13 = arith.mulf %12, %1 : vector<32x64xf32>
    %14 = arith.addf %10, %13 : vector<32x64xf32>
    %c2 = arith.constant 2 : index
    %15 = memref.load %arg0[%c2] : memref<10xf32, #tpu.memory_space<smem>>
    %16 = vector.broadcast %15 : f32 to vector<32x64xf32>
    %17 = arith.mulf %16, %2 : vector<32x64xf32>
    %18 = arith.addf %14, %17 : vector<32x64xf32>
    %c3 = arith.constant 3 : index
    %19 = memref.load %arg0[%c3] : memref<10xf32, #tpu.memory_space<smem>>
    %20 = vector.broadcast %19 : f32 to vector<32x64xf32>
    %21 = arith.mulf %20, %3 : vector<32x64xf32>
    %22 = arith.addf %18, %21 : vector<32x64xf32>
    %c4 = arith.constant 4 : index
    %23 = memref.load %arg0[%c4] : memref<10xf32, #tpu.memory_space<smem>>
    %24 = vector.broadcast %23 : f32 to vector<32x64xf32>
    %25 = arith.mulf %24, %4 : vector<32x64xf32>
    %26 = arith.addf %22, %25 : vector<32x64xf32>
    %c0_7 = arith.constant 0 : index
    %c0_8 = arith.constant 0 : index
    %c0_9 = arith.constant 0 : index
    %27 = vector.load %arg7[%c0_7, %c0_8, %c0_9] : memref<2x32x32xf32, #tpu.memory_space<vmem>>, vector<1x32x32xf32>
    %28 = vector.shape_cast %27 : vector<1x32x32xf32> to vector<32x32xf32>
    %cst = arith.constant dense<0.000000e+00> : vector<32x64xf32>
    %29 = tpu.matmul %28, %26, %cst {dimension_numbers = #tpu.dot_dimension_numbers<[1], [0], [0], [1], [0, 0, 1, 1], [], []>} : vector<32x32xf32>, vector<32x64xf32>, vector<32x64xf32> -> vector<32x64xf32>
    %c5 = arith.constant 5 : index
    %30 = memref.load %arg0[%c5] : memref<10xf32, #tpu.memory_space<smem>>
    %31 = vector.broadcast %30 : f32 to vector<32x64xf32>
    %32 = arith.mulf %31, %0 : vector<32x64xf32>
    %c1_10 = arith.constant 1 : index
    %33 = memref.load %arg1[%c1_10] : memref<2xf32, #tpu.memory_space<smem>>
    %34 = vector.broadcast %33 : f32 to vector<32x64xf32>
    %35 = arith.addf %32, %34 : vector<32x64xf32>
    %c6 = arith.constant 6 : index
    %36 = memref.load %arg0[%c6] : memref<10xf32, #tpu.memory_space<smem>>
    %37 = vector.broadcast %36 : f32 to vector<32x64xf32>
    %38 = arith.mulf %37, %1 : vector<32x64xf32>
    %39 = arith.addf %35, %38 : vector<32x64xf32>
    %c7 = arith.constant 7 : index
    %40 = memref.load %arg0[%c7] : memref<10xf32, #tpu.memory_space<smem>>
    %41 = vector.broadcast %40 : f32 to vector<32x64xf32>
    %42 = arith.mulf %41, %2 : vector<32x64xf32>
    %43 = arith.addf %39, %42 : vector<32x64xf32>
    %c8 = arith.constant 8 : index
    %44 = memref.load %arg0[%c8] : memref<10xf32, #tpu.memory_space<smem>>
    %45 = vector.broadcast %44 : f32 to vector<32x64xf32>
    %46 = arith.mulf %45, %3 : vector<32x64xf32>
    %47 = arith.addf %43, %46 : vector<32x64xf32>
    %c9 = arith.constant 9 : index
    %48 = memref.load %arg0[%c9] : memref<10xf32, #tpu.memory_space<smem>>
    %49 = vector.broadcast %48 : f32 to vector<32x64xf32>
    %50 = arith.mulf %49, %4 : vector<32x64xf32>
    %51 = arith.addf %47, %50 : vector<32x64xf32>
    %c1_11 = arith.constant 1 : index
    %c0_12 = arith.constant 0 : index
    %c0_13 = arith.constant 0 : index
    %52 = vector.load %arg7[%c1_11, %c0_12, %c0_13] : memref<2x32x32xf32, #tpu.memory_space<vmem>>, vector<1x32x32xf32>
    %53 = vector.shape_cast %52 : vector<1x32x32xf32> to vector<32x32xf32>
    %cst_14 = arith.constant dense<0.000000e+00> : vector<32x64xf32>
    %54 = tpu.matmul %53, %51, %cst_14 {dimension_numbers = #tpu.dot_dimension_numbers<[1], [0], [0], [1], [0, 0, 1, 1], [], []>} : vector<32x32xf32>, vector<32x64xf32>, vector<32x64xf32> -> vector<32x64xf32>
    %c0_15 = arith.constant 0 : index
    %c0_16 = arith.constant 0 : index
    %55 = vector.load %arg3[%c0_15, %c0_16] : memref<32x32xf32, #tpu.memory_space<vmem>>, vector<32x32xf32>
    %c0_17 = arith.constant 0 : index
    %c0_18 = arith.constant 0 : index
    %56 = vector.load %arg4[%c0_17, %c0_18] : memref<64x64xf32, #tpu.memory_space<vmem>>, vector<64x64xf32>
    %c0_19 = arith.constant 0 : index
    %c0_20 = arith.constant 0 : index
    %57 = vector.load %arg2[%c0_19, %c0_20] : memref<160x64xf32, #tpu.memory_space<vmem>>, vector<160x64xf32>
    %cst_21 = arith.constant dense<0.000000e+00> : vector<160x64xf32>
    %58 = tpu.matmul %57, %56, %cst_21 {dimension_numbers = #tpu.dot_dimension_numbers<[1], [0], [0], [1], [0, 0, 1, 1], [], []>} : vector<160x64xf32>, vector<64x64xf32>, vector<160x64xf32> -> vector<160x64xf32>
    %59 = vector.extract_strided_slice %58 {offsets = [0, 0], sizes = [32, 64], strides = [1, 1]} : vector<160x64xf32> to vector<32x64xf32>
    %60 = vector.extract_strided_slice %58 {offsets = [32, 0], sizes = [32, 64], strides = [1, 1]} : vector<160x64xf32> to vector<32x64xf32>
    %61 = vector.extract_strided_slice %58 {offsets = [64, 0], sizes = [32, 64], strides = [1, 1]} : vector<160x64xf32> to vector<32x64xf32>
    %62 = vector.extract_strided_slice %58 {offsets = [96, 0], sizes = [32, 64], strides = [1, 1]} : vector<160x64xf32> to vector<32x64xf32>
    %63 = vector.extract_strided_slice %58 {offsets = [128, 0], sizes = [32, 64], strides = [1, 1]} : vector<160x64xf32> to vector<32x64xf32>
    %cst_22 = arith.constant dense<0.000000e+00> : vector<32x64xf32>
    %64 = tpu.matmul %29, %56, %cst_22 {dimension_numbers = #tpu.dot_dimension_numbers<[1], [0], [0], [1], [0, 0, 1, 1], [], []>} : vector<32x64xf32>, vector<64x64xf32>, vector<32x64xf32> -> vector<32x64xf32>
    %cst_23 = arith.constant dense<0.000000e+00> : vector<32x64xf32>
    %65 = tpu.matmul %54, %56, %cst_23 {dimension_numbers = #tpu.dot_dimension_numbers<[1], [0], [0], [1], [0, 0, 1, 1], [], []>} : vector<32x64xf32>, vector<64x64xf32>, vector<32x64xf32> -> vector<32x64xf32>
    %cst_24 = arith.constant dense<0.000000e+00> : vector<32x64xf32>
    %66 = tpu.matmul %55, %0, %cst_24 {dimension_numbers = #tpu.dot_dimension_numbers<[1], [0], [0], [1], [0, 0, 1, 1], [], []>} : vector<32x32xf32>, vector<32x64xf32>, vector<32x64xf32> -> vector<32x64xf32>
    %cst_25 = arith.constant dense<0.000000e+00> : vector<32x64xf32>
    %67 = tpu.matmul %55, %1, %cst_25 {dimension_numbers = #tpu.dot_dimension_numbers<[1], [0], [0], [1], [0, 0, 1, 1], [], []>} : vector<32x32xf32>, vector<32x64xf32>, vector<32x64xf32> -> vector<32x64xf32>
    %cst_26 = arith.constant dense<0.000000e+00> : vector<32x64xf32>
    %68 = tpu.matmul %55, %2, %cst_26 {dimension_numbers = #tpu.dot_dimension_numbers<[1], [0], [0], [1], [0, 0, 1, 1], [], []>} : vector<32x32xf32>, vector<32x64xf32>, vector<32x64xf32> -> vector<32x64xf32>
    %cst_27 = arith.constant dense<0.000000e+00> : vector<32x64xf32>
    %69 = tpu.matmul %55, %3, %cst_27 {dimension_numbers = #tpu.dot_dimension_numbers<[1], [0], [0], [1], [0, 0, 1, 1], [], []>} : vector<32x32xf32>, vector<32x64xf32>, vector<32x64xf32> -> vector<32x64xf32>
    %cst_28 = arith.constant dense<0.000000e+00> : vector<32x64xf32>
    %70 = tpu.matmul %55, %4, %cst_28 {dimension_numbers = #tpu.dot_dimension_numbers<[1], [0], [0], [1], [0, 0, 1, 1], [], []>} : vector<32x32xf32>, vector<32x64xf32>, vector<32x64xf32> -> vector<32x64xf32>
    %cst_29 = arith.constant dense<0.000000e+00> : vector<32x64xf32>
    %71 = tpu.matmul %55, %29, %cst_29 {dimension_numbers = #tpu.dot_dimension_numbers<[1], [0], [0], [1], [0, 0, 1, 1], [], []>} : vector<32x32xf32>, vector<32x64xf32>, vector<32x64xf32> -> vector<32x64xf32>
    %cst_30 = arith.constant dense<0.000000e+00> : vector<32x64xf32>
    %72 = tpu.matmul %55, %54, %cst_30 {dimension_numbers = #tpu.dot_dimension_numbers<[1], [0], [0], [1], [0, 0, 1, 1], [], []>} : vector<32x32xf32>, vector<32x64xf32>, vector<32x64xf32> -> vector<32x64xf32>
    %73 = arith.mulf %29, %70 : vector<32x64xf32>
    %74 = arith.mulf %54, %63 : vector<32x64xf32>
    %75 = arith.addf %73, %74 : vector<32x64xf32>
    %cst_31 = arith.constant 0.000000e+00 : f32
    %76 = vector.broadcast %cst_31 : f32 to vector<32x64xf32>
    %77 = arith.subf %76, %75 : vector<32x64xf32>
    %78 = arith.subf %64, %72 : vector<32x64xf32>
    %cst_32 = arith.constant -5.000000e-01 : f32
    %79 = vector.broadcast %cst_32 : f32 to vector<32x64xf32>
    %80 = arith.mulf %79, %78 : vector<32x64xf32>
    %81 = arith.addf %71, %65 : vector<32x64xf32>
    %82 = arith.addf %0, %3 : vector<32x64xf32>
    %cst_33 = arith.constant 6.100000e-02 : f32
    %83 = vector.broadcast %cst_33 : f32 to vector<32x64xf32>
    %84 = arith.mulf %83, %4 : vector<32x64xf32>
    %cst_34 = arith.constant 6.600000e-02 : f32
    %85 = vector.broadcast %cst_34 : f32 to vector<32x64xf32>
    %86 = arith.subf %85, %84 : vector<32x64xf32>
    %cst_35 = arith.constant 0.000000e+00 : f32
    %87 = vector.broadcast %cst_35 : f32 to vector<32x64xf32>
    %88 = arith.subf %87, %86 : vector<32x64xf32>
    %cst_36 = arith.constant 3.180000e-01 : f32
    %89 = vector.broadcast %cst_36 : f32 to vector<32x64xf32>
    %90 = arith.mulf %89, %4 : vector<32x64xf32>
    %cst_37 = arith.constant 4.890000e-01 : f32
    %91 = vector.broadcast %cst_37 : f32 to vector<32x64xf32>
    %92 = arith.addf %91, %90 : vector<32x64xf32>
    %93 = arith.mulf %92, %81 : vector<32x64xf32>
    %94 = arith.addf %88, %93 : vector<32x64xf32>
    %cst_38 = arith.constant 3.930000e-01 : f32
    %95 = vector.broadcast %cst_38 : f32 to vector<32x64xf32>
    %96 = arith.mulf %95, %4 : vector<32x64xf32>
    %cst_39 = arith.constant 5.640000e-01 : f32
    %97 = vector.broadcast %cst_39 : f32 to vector<32x64xf32>
    %98 = arith.subf %97, %96 : vector<32x64xf32>
    %99 = arith.mulf %98, %82 : vector<32x64xf32>
    %100 = arith.addf %94, %99 : vector<32x64xf32>
    %cst_40 = arith.constant 3.700000e-02 : f32
    %101 = vector.broadcast %cst_40 : f32 to vector<32x64xf32>
    %102 = arith.mulf %101, %4 : vector<32x64xf32>
    %cst_41 = arith.constant 4.700000e-02 : f32
    %103 = vector.broadcast %cst_41 : f32 to vector<32x64xf32>
    %104 = arith.subf %103, %102 : vector<32x64xf32>
    %105 = arith.mulf %104, %82 : vector<32x64xf32>
    %106 = arith.addf %1, %2 : vector<32x64xf32>
    %107 = arith.subf %3, %0 : vector<32x64xf32>
    %108 = arith.mulf %80, %106 : vector<32x64xf32>
    %109 = arith.mulf %80, %107 : vector<32x64xf32>
    %110 = arith.mulf %80, %107 : vector<32x64xf32>
    %cst_42 = arith.constant 0.000000e+00 : f32
    %111 = vector.broadcast %cst_42 : f32 to vector<32x64xf32>
    %112 = arith.subf %111, %80 : vector<32x64xf32>
    %113 = arith.mulf %112, %106 : vector<32x64xf32>
    %c0_43 = arith.constant 0 : index
    %c0_44 = arith.constant 0 : index
    %114 = vector.load %arg5[%c0_43, %c0_44] : memref<32x32xf32, #tpu.memory_space<vmem>>, vector<32x32xf32>
    %115 = arith.mulf %29, %66 : vector<32x64xf32>
    %116 = arith.mulf %54, %59 : vector<32x64xf32>
    %117 = arith.addf %115, %116 : vector<32x64xf32>
    %118 = arith.addf %117, %108 : vector<32x64xf32>
    %119 = arith.mulf %100, %0 : vector<32x64xf32>
    %120 = arith.addf %119, %105 : vector<32x64xf32>
    %121 = arith.subf %120, %118 : vector<32x64xf32>
    %cst_45 = arith.constant dense<0.000000e+00> : vector<32x64xf32>
    %122 = tpu.matmul %114, %121, %cst_45 {dimension_numbers = #tpu.dot_dimension_numbers<[1], [0], [0], [1], [0, 0, 1, 1], [], []>} : vector<32x32xf32>, vector<32x64xf32>, vector<32x64xf32> -> vector<32x64xf32>
    %c0_46 = arith.constant 0 : index
    %c0_47 = arith.constant 0 : index
    %123 = vector.load %arg8[%c0_46, %c0_47] : memref<160x64xf32, #tpu.memory_space<vmem>>, vector<32x64xf32>
    tpu.vector_store %arg8[%c0_46, %c0_47], %122 {strides = array<i32>} : memref<160x64xf32, #tpu.memory_space<vmem>>, vector<32x64xf32>,
    %124 = arith.mulf %29, %67 : vector<32x64xf32>
    %125 = arith.mulf %54, %60 : vector<32x64xf32>
    %126 = arith.addf %124, %125 : vector<32x64xf32>
    %127 = arith.addf %126, %109 : vector<32x64xf32>
    %128 = arith.mulf %100, %1 : vector<32x64xf32>
    %129 = arith.subf %128, %127 : vector<32x64xf32>
    %cst_48 = arith.constant dense<0.000000e+00> : vector<32x64xf32>
    %130 = tpu.matmul %114, %129, %cst_48 {dimension_numbers = #tpu.dot_dimension_numbers<[1], [0], [0], [1], [0, 0, 1, 1], [], []>} : vector<32x32xf32>, vector<32x64xf32>, vector<32x64xf32> -> vector<32x64xf32>
    %c32_49 = arith.constant 32 : index
    %c0_50 = arith.constant 0 : index
    %131 = vector.load %arg8[%c32_49, %c0_50] : memref<160x64xf32, #tpu.memory_space<vmem>>, vector<32x64xf32>
    tpu.vector_store %arg8[%c32_49, %c0_50], %130 {strides = array<i32>} : memref<160x64xf32, #tpu.memory_space<vmem>>, vector<32x64xf32>,
    %132 = arith.mulf %29, %68 : vector<32x64xf32>
    %133 = arith.mulf %54, %61 : vector<32x64xf32>
    %134 = arith.addf %132, %133 : vector<32x64xf32>
    %135 = arith.addf %134, %110 : vector<32x64xf32>
    %136 = arith.mulf %100, %2 : vector<32x64xf32>
    %137 = arith.subf %136, %135 : vector<32x64xf32>
    %cst_51 = arith.constant dense<0.000000e+00> : vector<32x64xf32>
    %138 = tpu.matmul %114, %137, %cst_51 {dimension_numbers = #tpu.dot_dimension_numbers<[1], [0], [0], [1], [0, 0, 1, 1], [], []>} : vector<32x32xf32>, vector<32x64xf32>, vector<32x64xf32> -> vector<32x64xf32>
    %c64_52 = arith.constant 64 : index
    %c0_53 = arith.constant 0 : index
    %139 = vector.load %arg8[%c64_52, %c0_53] : memref<160x64xf32, #tpu.memory_space<vmem>>, vector<32x64xf32>
    tpu.vector_store %arg8[%c64_52, %c0_53], %138 {strides = array<i32>} : memref<160x64xf32, #tpu.memory_space<vmem>>, vector<32x64xf32>,
    %140 = arith.mulf %29, %69 : vector<32x64xf32>
    %141 = arith.mulf %54, %62 : vector<32x64xf32>
    %142 = arith.addf %140, %141 : vector<32x64xf32>
    %143 = arith.addf %142, %113 : vector<32x64xf32>
    %144 = arith.mulf %100, %3 : vector<32x64xf32>
    %145 = arith.subf %144, %143 : vector<32x64xf32>
    %cst_54 = arith.constant dense<0.000000e+00> : vector<32x64xf32>
    %146 = tpu.matmul %114, %145, %cst_54 {dimension_numbers = #tpu.dot_dimension_numbers<[1], [0], [0], [1], [0, 0, 1, 1], [], []>} : vector<32x32xf32>, vector<32x64xf32>, vector<32x64xf32> -> vector<32x64xf32>
    %c96_55 = arith.constant 96 : index
    %c0_56 = arith.constant 0 : index
    %147 = vector.load %arg8[%c96_55, %c0_56] : memref<160x64xf32, #tpu.memory_space<vmem>>, vector<32x64xf32>
    tpu.vector_store %arg8[%c96_55, %c0_56], %146 {strides = array<i32>} : memref<160x64xf32, #tpu.memory_space<vmem>>, vector<32x64xf32>,
    %cst_57 = arith.constant dense<0.000000e+00> : vector<32x64xf32>
    %148 = tpu.matmul %114, %77, %cst_57 {dimension_numbers = #tpu.dot_dimension_numbers<[1], [0], [0], [1], [0, 0, 1, 1], [], []>} : vector<32x32xf32>, vector<32x64xf32>, vector<32x64xf32> -> vector<32x64xf32>
    %c128_58 = arith.constant 128 : index
    %c0_59 = arith.constant 0 : index
    %149 = vector.load %arg8[%c128_58, %c0_59] : memref<160x64xf32, #tpu.memory_space<vmem>>, vector<32x64xf32>
    tpu.vector_store %arg8[%c128_58, %c0_59], %148 {strides = array<i32>} : memref<160x64xf32, #tpu.memory_space<vmem>>, vector<32x64xf32>,
    %c0_60 = arith.constant 0 : index
    %c0_61 = arith.constant 0 : index
    %150 = vector.load %arg8[%c0_60, %c0_61] : memref<160x64xf32, #tpu.memory_space<vmem>>, vector<160x64xf32>
    %c0_62 = arith.constant 0 : index
    %c0_63 = arith.constant 0 : index
    %151 = vector.load %arg6[%c0_62, %c0_63] : memref<64x64xf32, #tpu.memory_space<vmem>>, vector<64x64xf32>
    %cst_64 = arith.constant dense<0.000000e+00> : vector<160x64xf32>
    %152 = tpu.matmul %150, %151, %cst_64 {dimension_numbers = #tpu.dot_dimension_numbers<[1], [0], [0], [1], [0, 0, 1, 1], [], []>} : vector<160x64xf32>, vector<64x64xf32>, vector<160x64xf32> -> vector<160x64xf32>
    %c0_65 = arith.constant 0 : index
    %c0_66 = arith.constant 0 : index
    %153 = vector.load %arg8[%c0_65, %c0_66] : memref<160x64xf32, #tpu.memory_space<vmem>>, vector<160x64xf32>
    tpu.vector_store %arg8[%c0_65, %c0_66], %152 {strides = array<i32>} : memref<160x64xf32, #tpu.memory_space<vmem>>, vector<160x64xf32>,
    return
  }
}

</mosaic_0001>

<llo_original>
// kernel: closed_fly_loop_forward.1
$region0: #{closed_fly_loop_forward.1}
  #allocation0 [shape = 'u32[]', space=smem, size = 0x4, offset = 0x4, fixed_abs, tag = 'smem constant byte address 0x4 - core index']
  #allocation1 [shape = 'u32[144,128]{1,0:T(1,128)}', space=vmem, size = 0x12000, scoped, tag = 'internal scratch']
  %s0 = inlined_call_operand.vmem [shape: f32[10], index: 0, kind: input, shape index: {}]
  %s1 = inlined_call_operand.vmem [shape: f32[2], index: 1, kind: input, shape index: {}]
  %s2 = inlined_call_operand.hbm [shape: f32[160,64], index: 2, kind: input, shape index: {}]
  %s3 = inlined_call_operand.hbm [shape: f32[32,32], index: 3, kind: input, shape index: {}]
  %s4 = inlined_call_operand.hbm [shape: f32[64,64], index: 4, kind: input, shape index: {}]
  %s5 = inlined_call_operand.hbm [shape: f32[32,32], index: 5, kind: input, shape index: {}]
  %s6 = inlined_call_operand.hbm [shape: f32[64,64], index: 6, kind: input, shape index: {}]
  %s7 = inlined_call_operand.hbm [shape: f32[2,32,32], index: 7, kind: input, shape index: {}]
  %s8 = inlined_call_operand.hbm [shape: f32[160,64], index: 8, kind: output, shape index: {}]
  %s9 = sld [smem:[#allocation0]]
  $region74: #{closed_fly_loop_forward.1} parent=0
    _
  %s11 = ssub.s32 1, %s9
  %s12 = scalar_select 0, %s11, %s9
  $region1: #{closed_fly_loop_forward.1} parent=0
    #allocation2 [shape = 'u8[512]{0}', space=smem, size = 0x200, scoped, tag = 'input window, operand 0, single buffered']
    #allocation3 [shape = 's32[1]{0}', space=sflag, size = 0x4, scoped, tag = 'scoped memory for closed_fly_loop_forward.1']
    #allocation4 [shape = 's32[1]{0}', space=sflag, size = 0x4, scoped, tag = 'scoped memory for closed_fly_loop_forward.1']
    #allocation5 [shape = 's32[1]{0}', space=sflag, size = 0x4, scoped, tag = 'scoped memory for closed_fly_loop_forward.1']
    #allocation6 [shape = 'u8[512]{0}', space=smem, size = 0x200, scoped, tag = 'input window, operand 1, single buffered']
    #allocation7 [shape = 's32[1]{0}', space=sflag, size = 0x4, scoped, tag = 'scoped memory for closed_fly_loop_forward.1']
    #allocation8 [shape = 'u8[81920]{0}', space=vmem, size = 0x14000, scoped, tag = 'input window, operand 2, single buffered']
    #allocation9 [shape = 'u8[16384]{0}', space=vmem, size = 0x4000, scoped, tag = 'input window, operand 3, single buffered']
    #allocation10 [shape = 's32[1]{0}', space=sflag, size = 0x4, scoped, tag = 'scoped memory for closed_fly_loop_forward.1']
    #allocation11 [shape = 'u8[32768]{0}', space=vmem, size = 0x8000, scoped, tag = 'input window, operand 4, single buffered']
    #allocation12 [shape = 'u8[16384]{0}', space=vmem, size = 0x4000, scoped, tag = 'input window, operand 5, single buffered']
    #allocation13 [shape = 's32[1]{0}', space=sflag, size = 0x4, scoped, tag = 'scoped memory for closed_fly_loop_forward.1']
    #allocation14 [shape = 'u8[32768]{0}', space=vmem, size = 0x8000, scoped, tag = 'input window, operand 6, single buffered']
    #allocation15 [shape = 'u8[32768]{0}', space=vmem, size = 0x8000, scoped, tag = 'input window, operand 7, single buffered']
    #allocation16 [shape = 's32[1]{0}', space=sflag, size = 0x4, scoped, tag = 'scoped memory for closed_fly_loop_forward.1']
    #allocation17 [shape = 'u8[81920]{0}', space=vmem, size = 0x14000, scoped, tag = 'output window, operand 0, single buffered']
    %13 = vsyncpa [#allocation5], 0
    %14 = vsyncpa [#allocation7], 0
    %15 = vsyncpa [#allocation3], 0
    %16 = vsyncpa [#allocation10], 0
    %17 = vsyncpa [#allocation13], 0
    %18 = vsyncpa [#allocation16], 0
    %19 = vsyncpa [#allocation4], 0
    // Predicated region
    $region2: #{closed_fly_loop_forward.1} parent=1 // pred_check
      _
    $region3: #{closed_fly_loop_forward.1} parent=1 // pred_check_branch
      %21 = sbr.rel (0) target = $region5
    $region4: #{closed_fly_loop_forward.1} parent=1 // pred_region
      %s23 = ssub.s32 16, 16
      %24 = vsyncadd [#allocation5], %s23
      %s26 = sshll.u32 %s0, 4
      %s27 = int_to_ptr.vmem [resolvable:$true] %s26
      %29 = dma.vmem_to_smem %s27, 16, [#allocation2], [#allocation5]
    $region5: #{closed_fly_loop_forward.1} parent=1 // pred_fallthru
      _
    // Predicated region
    $region6: #{closed_fly_loop_forward.1} parent=1 // pred_check
      _
    $region7: #{closed_fly_loop_forward.1} parent=1 // pred_check_branch
      %31 = sbr.rel (0) target = $region9
    $region8: #{closed_fly_loop_forward.1} parent=1 // pred_region
      %s33 = ssub.s32 16, 16
      %34 = vsyncadd [#allocation7], %s33
      %s36 = sshll.u32 %s1, 4
      %s37 = int_to_ptr.vmem [resolvable:$true] %s36
      %39 = dma.vmem_to_smem %s37, 16, [#allocation6], [#allocation7]
    $region9: #{closed_fly_loop_forward.1} parent=1 // pred_fallthru
      _
    // Predicated region
    $region10: #{closed_fly_loop_forward.1} parent=1 // pred_check
      _
    $region11: #{closed_fly_loop_forward.1} parent=1 // pred_check_branch
      %41 = sbr.rel (0) target = $region13
    $region12: #{closed_fly_loop_forward.1} parent=1 // pred_region
      %s43 = ssub.s32 2560, 2560
      %44 = vsyncadd [#allocation3], %s43
      %s45 = sshll.u32 [#allocation8], 4
      %s46 = int_to_ptr.vmem [resolvable:$true] %s45
      %51 = dma.hbm_to_vmem [thread:$0]  %s2, 2560, %s46, [#allocation3], 128, 128, 8
    $region13: #{closed_fly_loop_forward.1} parent=1 // pred_fallthru
      _
    // Predicated region
    $region14: #{closed_fly_loop_forward.1} parent=1 // pred_check
      _
    $region15: #{closed_fly_loop_forward.1} parent=1 // pred_check_branch
      %53 = sbr.rel (0) target = $region17
    $region16: #{closed_fly_loop_forward.1} parent=1 // pred_region
      %s55 = ssub.s32 512, 512
      %56 = vsyncadd [#allocation10], %s55
      %s57 = sshll.u32 [#allocation9], 4
      %s58 = int_to_ptr.vmem [resolvable:$true] %s57
      %63 = dma.hbm_to_vmem [thread:$0]  %s3, 512, %s58, [#allocation10], 128, 128, 8
    $region17: #{closed_fly_loop_forward.1} parent=1 // pred_fallthru
      _
    // Predicated region
    $region18: #{closed_fly_loop_forward.1} parent=1 // pred_check
      _
    $region19: #{closed_fly_loop_forward.1} parent=1 // pred_check_branch
      %65 = sbr.rel (0) target = $region21
    $region20: #{closed_fly_loop_forward.1} parent=1 // pred_region
      %s67 = ssub.s32 1024, 1024
      %68 = vsyncadd [#allocation10], %s67
      %s69 = sshll.u32 [#allocation11], 4
      %s70 = int_to_ptr.vmem [resolvable:$true] %s69
      %75 = dma.hbm_to_vmem [thread:$0]  %s4, 1024, %s70, [#allocation10], 128, 128, 8
    $region21: #{closed_fly_loop_forward.1} parent=1 // pred_fallthru
      _
    // Predicated region
    $region22: #{closed_fly_loop_forward.1} parent=1 // pred_check
      _
    $region23: #{closed_fly_loop_forward.1} parent=1 // pred_check_branch
      %77 = sbr.rel (0) target = $region25
    $region24: #{closed_fly_loop_forward.1} parent=1 // pred_region
      %s79 = ssub.s32 512, 512
      %80 = vsyncadd [#allocation13], %s79
      %s81 = sshll.u32 [#allocation12], 4
      %s82 = int_to_ptr.vmem [resolvable:$true] %s81
      %87 = dma.hbm_to_vmem [thread:$0]  %s5, 512, %s82, [#allocation13], 128, 128, 8
    $region25: #{closed_fly_loop_forward.1} parent=1 // pred_fallthru
      _
    // Predicated region
    $region26: #{closed_fly_loop_forward.1} parent=1 // pred_check
      _
    $region27: #{closed_fly_loop_forward.1} parent=1 // pred_check_branch
      %89 = sbr.rel (0) target = $region29
    $region28: #{closed_fly_loop_forward.1} parent=1 // pred_region
      %s91 = ssub.s32 1024, 1024
      %92 = vsyncadd [#allocation13], %s91
      %s93 = sshll.u32 [#allocation14], 4
      %s94 = int_to_ptr.vmem [resolvable:$true] %s93
      %99 = dma.hbm_to_vmem [thread:$0]  %s6, 1024, %s94, [#allocation13], 128, 128, 8
    $region29: #{closed_fly_loop_forward.1} parent=1 // pred_fallthru
      _
    // Predicated region
    $region30: #{closed_fly_loop_forward.1} parent=1 // pred_check
      _
    $region31: #{closed_fly_loop_forward.1} parent=1 // pred_check_branch
      %101 = sbr.rel (0) target = $region33
    $region32: #{closed_fly_loop_forward.1} parent=1 // pred_region
      %s103 = ssub.s32 1024, 1024
      %104 = vsyncadd [#allocation16], %s103
      %s105 = sshll.u32 [#allocation15], 4
      %s106 = int_to_ptr.vmem [resolvable:$true] %s105
      %111 = dma.hbm_to_vmem [thread:$0]  %s7, 1024, %s106, [#allocation16], 128, 128, 8
    $region33: #{closed_fly_loop_forward.1} parent=1 // pred_fallthru
      _
    // Predicated region
    $region34: #{closed_fly_loop_forward.1} parent=1 // pred_check
      _
    $region35: #{closed_fly_loop_forward.1} parent=1 // pred_check_branch
      %113 = sbr.rel (0) target = $region37
    $region36: #{closed_fly_loop_forward.1} parent=1 // pred_region
      %114 = dma.done [#allocation5], 16
    $region37: #{closed_fly_loop_forward.1} parent=1 // pred_fallthru
      _
    // Predicated region
    $region38: #{closed_fly_loop_forward.1} parent=1 // pred_check
      _
    $region39: #{closed_fly_loop_forward.1} parent=1 // pred_check_branch
      %116 = sbr.rel (0) target = $region41
    $region40: #{closed_fly_loop_forward.1} parent=1 // pred_region
      %117 = dma.done [#allocation7], 16
    $region41: #{closed_fly_loop_forward.1} parent=1 // pred_fallthru
      _
    // Predicated region
    $region42: #{closed_fly_loop_forward.1} parent=1 // pred_check
      _
    $region43: #{closed_fly_loop_forward.1} parent=1 // pred_check_branch
      %119 = sbr.rel (0) target = $region45
    $region44: #{closed_fly_loop_forward.1} parent=1 // pred_region
      %120 = dma.done [#allocation3], 2560
    $region45: #{closed_fly_loop_forward.1} parent=1 // pred_fallthru
      _
    // Predicated region
    $region46: #{closed_fly_loop_forward.1} parent=1 // pred_check
      _
    $region47: #{closed_fly_loop_forward.1} parent=1 // pred_check_branch
      %122 = sbr.rel (0) target = $region49
    $region48: #{closed_fly_loop_forward.1} parent=1 // pred_region
      %123 = dma.done [#allocation10], 512
    $region49: #{closed_fly_loop_forward.1} parent=1 // pred_fallthru
      _
    // Predicated region
    $region50: #{closed_fly_loop_forward.1} parent=1 // pred_check
      _
    $region51: #{closed_fly_loop_forward.1} parent=1 // pred_check_branch
      %125 = sbr.rel (0) target = $region53
    $region52: #{closed_fly_loop_forward.1} parent=1 // pred_region
      %126 = dma.done [#allocation10], 1024
    $region53: #{closed_fly_loop_forward.1} parent=1 // pred_fallthru
      _
    // Predicated region
    $region54: #{closed_fly_loop_forward.1} parent=1 // pred_check
      _
    $region55: #{closed_fly_loop_forward.1} parent=1 // pred_check_branch
      %128 = sbr.rel (0) target = $region57
    $region56: #{closed_fly_loop_forward.1} parent=1 // pred_region
      %129 = dma.done [#allocation13], 512
    $region57: #{closed_fly_loop_forward.1} parent=1 // pred_fallthru
      _
    // Predicated region
    $region58: #{closed_fly_loop_forward.1} parent=1 // pred_check
      _
    $region59: #{closed_fly_loop_forward.1} parent=1 // pred_check_branch
      %131 = sbr.rel (0) target = $region61
    $region60: #{closed_fly_loop_forward.1} parent=1 // pred_region
      %132 = dma.done [#allocation13], 1024
    $region61: #{closed_fly_loop_forward.1} parent=1 // pred_fallthru
      _
    // Predicated region
    $region62: #{closed_fly_loop_forward.1} parent=1 // pred_check
      _
    $region63: #{closed_fly_loop_forward.1} parent=1 // pred_check_branch
      %134 = sbr.rel (0) target = $region65
    $region64: #{closed_fly_loop_forward.1} parent=1 // pred_region
      %135 = dma.done [#allocation16], 1024
    $region65: #{closed_fly_loop_forward.1} parent=1 // pred_fallthru
      _
    %136 = sfence
    %v137 = vld [vmem:[#allocation8] sm:$0xff]
    %v138 = vld [vmem:[#allocation8 + $0x8] sm:$0xff]
    %v139 = vld [vmem:[#allocation8 + $0x10] sm:$0xff]
    %v140 = vld [vmem:[#allocation8 + $0x18] sm:$0xff]
    %v141 = vld [vmem:[#allocation8 + $0x20] sm:$0xff]
    %v142 = vld [vmem:[#allocation8 + $0x28] sm:$0xff]
    %v143 = vld [vmem:[#allocation8 + $0x30] sm:$0xff]
    %v144 = vld [vmem:[#allocation8 + $0x38] sm:$0xff]
    %v145 = vld [vmem:[#allocation8 + $0x40] sm:$0xff]
    %v146 = vld [vmem:[#allocation8 + $0x48] sm:$0xff]
    %v147 = vld [vmem:[#allocation8 + $0x50] sm:$0xff]
    %v148 = vld [vmem:[#allocation8 + $0x58] sm:$0xff]
    %v149 = vld [vmem:[#allocation8 + $0x60] sm:$0xff]
    %v150 = vld [vmem:[#allocation8 + $0x68] sm:$0xff]
    %v151 = vld [vmem:[#allocation8 + $0x70] sm:$0xff]
    %v152 = vld [vmem:[#allocation8 + $0x78] sm:$0xff]
    %v153 = vld [vmem:[#allocation8 + $0x80] sm:$0xff]
    %v154 = vld [vmem:[#allocation8 + $0x88] sm:$0xff]
    %v155 = vld [vmem:[#allocation8 + $0x90] sm:$0xff]
    %v156 = vld [vmem:[#allocation8 + $0x98] sm:$0xff]
    %s157 = sld [smem:[#allocation2]]
    %v158 = vstv %s157
    %v159 = vmul.f32 %v158, %v137
    %v160 = vmul.f32 %v158, %v138
    %v161 = vmul.f32 %v158, %v139
    %v162 = vmul.f32 %v158, %v140
    %s163 = sld [smem:[#allocation6]]
    %v164 = vstv %s163
    %v165 = vadd.f32 %v159, %v164
    %v166 = vadd.f32 %v160, %v164
    %v167 = vadd.f32 %v161, %v164
    %v168 = vadd.f32 %v162, %v164
    %s169 = sld [smem:[#allocation2 + $0x1]]
    %v170 = vstv %s169
    %v171 = vmul.f32 %v170, %v141
    %v172 = vmul.f32 %v170, %v142
    %v173 = vmul.f32 %v170, %v143
    %v174 = vmul.f32 %v170, %v144
    %v175 = vadd.f32 %v165, %v171
    %v176 = vadd.f32 %v166, %v172
    %v177 = vadd.f32 %v167, %v173
    %v178 = vadd.f32 %v168, %v174
    %s179 = sld [smem:[#allocation2 + $0x2]]
    %v180 = vstv %s179
    %v181 = vmul.f32 %v180, %v145
    %v182 = vmul.f32 %v180, %v146
    %v183 = vmul.f32 %v180, %v147
    %v184 = vmul.f32 %v180, %v148
    %v185 = vadd.f32 %v175, %v181
    %v186 = vadd.f32 %v176, %v182
    %v187 = vadd.f32 %v177, %v183
    %v188 = vadd.f32 %v178, %v184
    %s189 = sld [smem:[#allocation2 + $0x3]]
    %v190 = vstv %s189
    %v191 = vmul.f32 %v190, %v149
    %v192 = vmul.f32 %v190, %v150
    %v193 = vmul.f32 %v190, %v151
    %v194 = vmul.f32 %v190, %v152
    %v195 = vadd.f32 %v185, %v191
    %v196 = vadd.f32 %v186, %v192
    %v197 = vadd.f32 %v187, %v193
    %v198 = vadd.f32 %v188, %v194
    %s199 = sld [smem:[#allocation2 + $0x4]]
    %v200 = vstv %s199
    %v201 = vmul.f32 %v200, %v153
    %v202 = vmul.f32 %v200, %v154
    %v203 = vmul.f32 %v200, %v155
    %v204 = vmul.f32 %v200, %v156
    %v205 = vadd.f32 %v195, %v201
    %v206 = vadd.f32 %v196, %v202
    %v207 = vadd.f32 %v197, %v203
    %v208 = vadd.f32 %v198, %v204
    %v209 = vld [vmem:[#allocation15] sm:$0xff]
    %v210 = vld [vmem:[#allocation15 + $0x8] sm:$0xff]
    %v211 = vld [vmem:[#allocation15 + $0x10] sm:$0xff]
    %v212 = vld [vmem:[#allocation15 + $0x18] sm:$0xff]
    %vm213 = vcmask 261120
    %v215 = vsel %vm213, %v209, 0
    %v218 = vsel %vm213, %v210, 0
    %v221 = vsel %vm213, %v211, 0
    %v224 = vsel %vm213, %v212, 0
    %226 = vmatprep.subr.mxu0 0.0
    %227 = vmatpush1.msra.mxu0 0.0
    %228 = vmatprep.subr.mxu0 0.0
    %229 = vmatpush1.msra.mxu0 0.0
    %230 = vmatprep.subr.mxu0 0.0
    %231 = vmatpush1.msra.mxu0 0.0
    %232 = vmatprep.subr.mxu0 0.0
    %233 = vmatpush1.msra.mxu0 0.0
    %234 = vmatprep.subr.mxu0 0.0
    %235 = vmatpush1.msra.mxu0 0.0
    %236 = vmatprep.subr.mxu0 0.0
    %237 = vmatpush1.msra.mxu0 0.0
    %238 = vmatprep.subr.mxu0 0.0
    %239 = vmatpush1.msra.mxu0 0.0
    %240 = vmatprep.subr.mxu0 0.0
    %241 = vmatpush1.msra.mxu0 0.0
    %242 = vmatprep.subr.mxu0 0.0
    %243 = vmatpush1.msra.mxu0 0.0
    %244 = vmatprep.subr.mxu0 0.0
    %245 = vmatpush1.msra.mxu0 0.0
    %246 = vmatprep.subr.mxu0 0.0
    %247 = vmatpush1.msra.mxu0 0.0
    %248 = vmatprep.subr.mxu0 0.0
    %249 = vmatpush1.msra.mxu0 0.0
    %250 = vmatprep.subr.mxu0 0.0
    %251 = vmatpush1.msra.mxu0 %v208
    %252 = vmatprep.subr.mxu0 0.0
    %253 = vmatpush1.msra.mxu0 %v207
    %254 = vmatprep.subr.mxu0 0.0
    %255 = vmatpush1.msra.mxu0 %v206
    %256 = vmatprep.subr.mxu0 0.0
    %257 = vmatpush1.msra.mxu0 %v205
    %258 = vmatprep.subr.mxu0 0.0
    %259 = vmatpush2.msra.mxu0 0.0
    %260 = vmatprep.subr.mxu0 0.0
    %261 = vmatpush2.msra.mxu0 0.0
    %262 = vmatprep.subr.mxu0 0.0
    %263 = vmatpush2.msra.mxu0 0.0
    %264 = vmatprep.subr.mxu0 0.0
    %265 = vmatpush2.msra.mxu0 0.0
    %266 = vmatprep.subr.mxu0 0.0
    %267 = vmatpush2.msra.mxu0 0.0
    %268 = vmatprep.subr.mxu0 0.0
    %269 = vmatpush2.msra.mxu0 0.0
    %270 = vmatprep.subr.mxu0 0.0
    %271 = vmatpush2.msra.mxu0 0.0
    %272 = vmatprep.subr.mxu0 0.0
    %273 = vmatpush2.msra.mxu0 0.0
    %274 = vmatprep.subr.mxu0 0.0
    %275 = vmatpush2.msra.mxu0 0.0
    %276 = vmatprep.subr.mxu0 0.0
    %277 = vmatpush2.msra.mxu0 0.0
    %278 = vmatprep.subr.mxu0 0.0
    %279 = vmatpush2.msra.mxu0 0.0
    %280 = vmatprep.subr.mxu0 0.0
    %281 = vmatpush2.msra.mxu0 0.0
    %282 = vmatprep.subr.mxu0 0.0
    %283 = vmatpush2.msra.mxu0 0.0
    %284 = vmatprep.subr.mxu0 0.0
    %285 = vmatpush2.msra.mxu0 0.0
    %286 = vmatprep.subr.mxu0 0.0
    %287 = vmatpush2.msra.mxu0 0.0
    %288 = vmatprep.subr.mxu0 0.0
    %289 = vmatpush2.msra.mxu0 0.0
    %290 = vmatprep.mubr.f32.mxu0 0.0
    %291 = vmatmul.mubr.f32.gmra.mxu0 %v215
    %v292 = vpop.f32.mrf.mxu0
    %v293 = vadd.f32 0.0, %v292
    %v294 = vpop.f32.mrf.mxu0
    %295 = vmatprep.mubr.f32.mxu0 0.0
    %296 = vmatmul.mubr.f32.gmra.mxu0 %v218
    %v297 = vpop.f32.mrf.mxu0
    %v298 = vadd.f32 0.0, %v297
    %v299 = vpop.f32.mrf.mxu0
    %300 = vmatprep.mubr.f32.mxu0 0.0
    %301 = vmatmul.mubr.f32.gmra.mxu0 %v221
    %v302 = vpop.f32.mrf.mxu0
    %v303 = vadd.f32 0.0, %v302
    %v304 = vpop.f32.mrf.mxu0
    %305 = vmatprep.mubr.f32.mxu0 0.0
    %306 = vmatmul.mubr.f32.gmra.mxu0 %v224
    %v307 = vpop.f32.mrf.mxu0
    %v308 = vadd.f32 0.0, %v307
    %v309 = vpop.f32.mrf.mxu0
    %310 = vdwg.mxu0
    %s311 = sld [smem:[#allocation2 + $0x5]]
    %v312 = vstv %s311
    %v313 = vmul.f32 %v312, %v137
    %v314 = vmul.f32 %v312, %v138
    %v315 = vmul.f32 %v312, %v139
    %v316 = vmul.f32 %v312, %v140
    %s317 = sld [smem:[#allocation6 + $0x1]]
    %v318 = vstv %s317
    %v319 = vadd.f32 %v313, %v318
    %v320 = vadd.f32 %v314, %v318
    %v321 = vadd.f32 %v315, %v318
    %v322 = vadd.f32 %v316, %v318
    %s323 = sld [smem:[#allocation2 + $0x6]]
    %v324 = vstv %s323
    %v325 = vmul.f32 %v324, %v141
    %v326 = vmul.f32 %v324, %v142
    %v327 = vmul.f32 %v324, %v143
    %v328 = vmul.f32 %v324, %v144
    %v329 = vadd.f32 %v319, %v325
    %v330 = vadd.f32 %v320, %v326
    %v331 = vadd.f32 %v321, %v327
    %v332 = vadd.f32 %v322, %v328
    %s333 = sld [smem:[#allocation2 + $0x7]]
    %v334 = vstv %s333
    %v335 = vmul.f32 %v334, %v145
    %v336 = vmul.f32 %v334, %v146
    %v337 = vmul.f32 %v334, %v147
    %v338 = vmul.f32 %v334, %v148
    %v339 = vadd.f32 %v329, %v335
    %v340 = vadd.f32 %v330, %v336
    %v341 = vadd.f32 %v331, %v337
    %v342 = vadd.f32 %v332, %v338
    %s343 = sld [smem:[#allocation2 + $0x8]]
    %v344 = vstv %s343
    %v345 = vmul.f32 %v344, %v149
    %v346 = vmul.f32 %v344, %v150
    %v347 = vmul.f32 %v344, %v151
    %v348 = vmul.f32 %v344, %v152
    %v349 = vadd.f32 %v339, %v345
    %v350 = vadd.f32 %v340, %v346
    %v351 = vadd.f32 %v341, %v347
    %v352 = vadd.f32 %v342, %v348
    %s353 = sld [smem:[#allocation2 + $0x9]]
    %v354 = vstv %s353
    %v355 = vmul.f32 %v354, %v153
    %v356 = vmul.f32 %v354, %v154
    %v357 = vmul.f32 %v354, %v155
    %v358 = vmul.f32 %v354, %v156
    %v359 = vadd.f32 %v349, %v355
    %v360 = vadd.f32 %v350, %v356
    %v361 = vadd.f32 %v351, %v357
    %v362 = vadd.f32 %v352, %v358
    %s363 = scalar_lea.vmem [#allocation15], 32
    %v364 = vld [vmem:[%s363] sm:$0xff]
    %v365 = vld [vmem:[%s363 + $0x8] sm:$0xff]
    %v366 = vld [vmem:[%s363 + $0x10] sm:$0xff]
    %v367 = vld [vmem:[%s363 + $0x18] sm:$0xff]
    %v369 = vsel %vm213, %v364, 0
    %v372 = vsel %vm213, %v365, 0
    %v375 = vsel %vm213, %v366, 0
    %v378 = vsel %vm213, %v367, 0
    %380 = vmatprep.subr.mxu0 0.0
    %381 = vmatpush1.msra.mxu0 0.0
    %382 = vmatprep.subr.mxu0 0.0
    %383 = vmatpush1.msra.mxu0 0.0
    %384 = vmatprep.subr.mxu0 0.0
    %385 = vmatpush1.msra.mxu0 0.0
    %386 = vmatprep.subr.mxu0 0.0
    %387 = vmatpush1.msra.mxu0 0.0
    %388 = vmatprep.subr.mxu0 0.0
    %389 = vmatpush1.msra.mxu0 0.0
    %390 = vmatprep.subr.mxu0 0.0
    %391 = vmatpush1.msra.mxu0 0.0
    %392 = vmatprep.subr.mxu0 0.0
    %393 = vmatpush1.msra.mxu0 0.0
    %394 = vmatprep.subr.mxu0 0.0
    %395 = vmatpush1.msra.mxu0 0.0
    %396 = vmatprep.subr.mxu0 0.0
    %397 = vmatpush1.msra.mxu0 0.0
    %398 = vmatprep.subr.mxu0 0.0
    %399 = vmatpush1.msra.mxu0 0.0
    %400 = vmatprep.subr.mxu0 0.0
    %401 = vmatpush1.msra.mxu0 0.0
    %402 = vmatprep.subr.mxu0 0.0
    %403 = vmatpush1.msra.mxu0 0.0
    %404 = vmatprep.subr.mxu0 0.0
    %405 = vmatpush1.msra.mxu0 %v362
    %406 = vmatprep.subr.mxu0 0.0
    %407 = vmatpush1.msra.mxu0 %v361
    %408 = vmatprep.subr.mxu0 0.0
    %409 = vmatpush1.msra.mxu0 %v360
    %410 = vmatprep.subr.mxu0 0.0
    %411 = vmatpush1.msra.mxu0 %v359
    %412 = vmatprep.subr.mxu0 0.0
    %413 = vmatpush2.msra.mxu0 0.0
    %414 = vmatprep.subr.mxu0 0.0
    %415 = vmatpush2.msra.mxu0 0.0
    %416 = vmatprep.subr.mxu0 0.0
    %417 = vmatpush2.msra.mxu0 0.0
    %418 = vmatprep.subr.mxu0 0.0
    %419 = vmatpush2.msra.mxu0 0.0
    %420 = vmatprep.subr.mxu0 0.0
    %421 = vmatpush2.msra.mxu0 0.0
    %422 = vmatprep.subr.mxu0 0.0
    %423 = vmatpush2.msra.mxu0 0.0
    %424 = vmatprep.subr.mxu0 0.0
    %425 = vmatpush2.msra.mxu0 0.0
    %426 = vmatprep.subr.mxu0 0.0
    %427 = vmatpush2.msra.mxu0 0.0
    %428 = vmatprep.subr.mxu0 0.0
    %429 = vmatpush2.msra.mxu0 0.0
    %430 = vmatprep.subr.mxu0 0.0
    %431 = vmatpush2.msra.mxu0 0.0
    %432 = vmatprep.subr.mxu0 0.0
    %433 = vmatpush2.msra.mxu0 0.0
    %434 = vmatprep.subr.mxu0 0.0
    %435 = vmatpush2.msra.mxu0 0.0
    %436 = vmatprep.subr.mxu0 0.0
    %437 = vmatpush2.msra.mxu0 0.0
    %438 = vmatprep.subr.mxu0 0.0
    %439 = vmatpush2.msra.mxu0 0.0
    %440 = vmatprep.subr.mxu0 0.0
    %441 = vmatpush2.msra.mxu0 0.0
    %442 = vmatprep.subr.mxu0 0.0
    %443 = vmatpush2.msra.mxu0 0.0
    %444 = vmatprep.mubr.f32.mxu0 0.0
    %445 = vmatmul.mubr.f32.gmra.mxu0 %v369
    %v446 = vpop.f32.mrf.mxu0
    %v447 = vadd.f32 0.0, %v446
    %v448 = vpop.f32.mrf.mxu0
    %449 = vmatprep.mubr.f32.mxu0 0.0
    %450 = vmatmul.mubr.f32.gmra.mxu0 %v372
    %v451 = vpop.f32.mrf.mxu0
    %v452 = vadd.f32 0.0, %v451
    %v453 = vpop.f32.mrf.mxu0
    %454 = vmatprep.mubr.f32.mxu0 0.0
    %455 = vmatmul.mubr.f32.gmra.mxu0 %v375
    %v456 = vpop.f32.mrf.mxu0
    %v457 = vadd.f32 0.0, %v456
    %v458 = vpop.f32.mrf.mxu0
    %459 = vmatprep.mubr.f32.mxu0 0.0
    %460 = vmatmul.mubr.f32.gmra.mxu0 %v378
    %v461 = vpop.f32.mrf.mxu0
    %v462 = vadd.f32 0.0, %v461
    %v463 = vpop.f32.mrf.mxu0
    %464 = vdwg.mxu0
    %v465 = vld [vmem:[#allocation9] sm:$0xff]
    %v466 = vld [vmem:[#allocation9 + $0x8] sm:$0xff]
    %v467 = vld [vmem:[#allocation9 + $0x10] sm:$0xff]
    %v468 = vld [vmem:[#allocation9 + $0x18] sm:$0xff]
    %v469 = vld [vmem:[#allocation11] sm:$0xff]
    %v470 = vld [vmem:[#allocation11 + $0x8] sm:$0xff]
    %v471 = vld [vmem:[#allocation11 + $0x10] sm:$0xff]
    %v472 = vld [vmem:[#allocation11 + $0x18] sm:$0xff]
    %v473 = vld [vmem:[#allocation11 + $0x20] sm:$0xff]
    %v474 = vld [vmem:[#allocation11 + $0x28] sm:$0xff]
    %v475 = vld [vmem:[#allocation11 + $0x30] sm:$0xff]
    %v476 = vld [vmem:[#allocation11 + $0x38] sm:$0xff]
    %v477 = vld [vmem:[#allocation8] sm:$0xff]
    %v478 = vld [vmem:[#allocation8 + $0x8] sm:$0xff]
    %v479 = vld [vmem:[#allocation8 + $0x10] sm:$0xff]
    %v480 = vld [vmem:[#allocation8 + $0x18] sm:$0xff]
    %v481 = vld [vmem:[#allocation8 + $0x20] sm:$0xff]
    %v482 = vld [vmem:[#allocation8 + $0x28] sm:$0xff]
    %v483 = vld [vmem:[#allocation8 + $0x30] sm:$0xff]
    %v484 = vld [vmem:[#allocation8 + $0x38] sm:$0xff]
    %v485 = vld [vmem:[#allocation8 + $0x40] sm:$0xff]
    %v486 = vld [vmem:[#allocation8 + $0x48] sm:$0xff]
    %v487 = vld [vmem:[#allocation8 + $0x50] sm:$0xff]
    %v488 = vld [vmem:[#allocation8 + $0x58] sm:$0xff]
    %v489 = vld [vmem:[#allocation8 + $0x60] sm:$0xff]
    %v490 = vld [vmem:[#allocation8 + $0x68] sm:$0xff]
    %v491 = vld [vmem:[#allocation8 + $0x70] sm:$0xff]
    %v492 = vld [vmem:[#allocation8 + $0x78] sm:$0xff]
    %vm493 = vcmask 523264
    %v495 = vsel %vm493, %v477, 0
    %v498 = vsel %vm493, %v478, 0
    %v501 = vsel %vm493, %v479, 0
    %v504 = vsel %vm493, %v480, 0
    %v507 = vsel %vm493, %v481, 0
    %v510 = vsel %vm493, %v482, 0
    %v513 = vsel %vm493, %v483, 0
    %v516 = vsel %vm493, %v484, 0
    %v519 = vsel %vm493, %v485, 0
    %v522 = vsel %vm493, %v486, 0
    %v525 = vsel %vm493, %v487, 0
    %v528 = vsel %vm493, %v488, 0
    %v531 = vsel %vm493, %v489, 0
    %v534 = vsel %vm493, %v490, 0
    %v537 = vsel %vm493, %v491, 0
    %v540 = vsel %vm493, %v492, 0
    %v543 = vsel %vm493, %v153, 0
    %v546 = vsel %vm493, %v154, 0
    %v549 = vsel %vm493, %v155, 0
    %v552 = vsel %vm493, %v156, 0
    %554 = vmatprep.subr.mxu0 0.0
    %555 = vmatpush1.msra.mxu0 0.0
    %556 = vmatprep.subr.mxu0 0.0
    %557 = vmatpush1.msra.mxu0 0.0
    %558 = vmatprep.subr.mxu0 0.0
    %559 = vmatpush1.msra.mxu0 0.0
    %560 = vmatprep.subr.mxu0 0.0
    %561 = vmatpush1.msra.mxu0 0.0
    %562 = vmatprep.subr.mxu0 0.0
    %563 = vmatpush1.msra.mxu0 0.0
    %564 = vmatprep.subr.mxu0 0.0
    %565 = vmatpush1.msra.mxu0 0.0
    %566 = vmatprep.subr.mxu0 0.0
    %567 = vmatpush1.msra.mxu0 0.0
    %568 = vmatprep.subr.mxu0 0.0
    %569 = vmatpush1.msra.mxu0 0.0
    %570 = vmatprep.subr.mxu0 0.0
    %571 = vmatpush1.msra.mxu0 %v476
    %572 = vmatprep.subr.mxu0 0.0
    %573 = vmatpush1.msra.mxu0 %v475
    %574 = vmatprep.subr.mxu0 0.0
    %575 = vmatpush1.msra.mxu0 %v474
    %576 = vmatprep.subr.mxu0 0.0
    %577 = vmatpush1.msra.mxu0 %v473
    %578 = vmatprep.subr.mxu0 0.0
    %579 = vmatpush1.msra.mxu0 %v472
    %580 = vmatprep.subr.mxu0 0.0
    %581 = vmatpush1.msra.mxu0 %v471
    %582 = vmatprep.subr.mxu0 0.0
    %583 = vmatpush1.msra.mxu0 %v470
    %584 = vmatprep.subr.mxu0 0.0
    %585 = vmatpush1.msra.mxu0 %v469
    %586 = vmatprep.subr.mxu0 0.0
    %587 = vmatpush2.msra.mxu0 0.0
    %588 = vmatprep.subr.mxu0 0.0
    %589 = vmatpush2.msra.mxu0 0.0
    %590 = vmatprep.subr.mxu0 0.0
    %591 = vmatpush2.msra.mxu0 0.0
    %592 = vmatprep.subr.mxu0 0.0
    %593 = vmatpush2.msra.mxu0 0.0
    %594 = vmatprep.subr.mxu0 0.0
    %595 = vmatpush2.msra.mxu0 0.0
    %596 = vmatprep.subr.mxu0 0.0
    %597 = vmatpush2.msra.mxu0 0.0
    %598 = vmatprep.subr.mxu0 0.0
    %599 = vmatpush2.msra.mxu0 0.0
    %600 = vmatprep.subr.mxu0 0.0
    %601 = vmatpush2.msra.mxu0 0.0
    %602 = vmatprep.subr.mxu0 0.0
    %603 = vmatpush2.msra.mxu0 0.0
    %604 = vmatprep.subr.mxu0 0.0
    %605 = vmatpush2.msra.mxu0 0.0
    %606 = vmatprep.subr.mxu0 0.0
    %607 = vmatpush2.msra.mxu0 0.0
    %608 = vmatprep.subr.mxu0 0.0
    %609 = vmatpush2.msra.mxu0 0.0
    %610 = vmatprep.subr.mxu0 0.0
    %611 = vmatpush2.msra.mxu0 0.0
    %612 = vmatprep.subr.mxu0 0.0
    %613 = vmatpush2.msra.mxu0 0.0
    %614 = vmatprep.subr.mxu0 0.0
    %615 = vmatpush2.msra.mxu0 0.0
    %616 = vmatprep.subr.mxu0 0.0
    %617 = vmatpush2.msra.mxu0 0.0
    %618 = vmatprep.mubr.f32.mxu0 0.0
    %619 = vmatmul.mubr.f32.gmra.mxu0 %v495
    %v620 = vpop.f32.mrf.mxu0
    %v621 = vadd.f32 0.0, %v620
    %v622 = vpop.f32.mrf.mxu0
    %623 = vmatprep.mubr.f32.mxu0 0.0
    %624 = vmatmul.mubr.f32.gmra.mxu0 %v498
    %v625 = vpop.f32.mrf.mxu0
    %v626 = vadd.f32 0.0, %v625
    %v627 = vpop.f32.mrf.mxu0
    %628 = vmatprep.mubr.f32.mxu0 0.0
    %629 = vmatmul.mubr.f32.gmra.mxu0 %v501
    %v630 = vpop.f32.mrf.mxu0
    %v631 = vadd.f32 0.0, %v630
    %v632 = vpop.f32.mrf.mxu0
    %633 = vmatprep.mubr.f32.mxu0 0.0
    %634 = vmatmul.mubr.f32.gmra.mxu0 %v504
    %v635 = vpop.f32.mrf.mxu0
    %v636 = vadd.f32 0.0, %v635
    %v637 = vpop.f32.mrf.mxu0
    %638 = vmatprep.mubr.f32.mxu0 0.0
    %639 = vmatmul.mubr.f32.gmra.mxu0 %v507
    %v640 = vpop.f32.mrf.mxu0
    %v641 = vadd.f32 0.0, %v640
    %v642 = vpop.f32.mrf.mxu0
    %643 = vmatprep.mubr.f32.mxu0 0.0
    %644 = vmatmul.mubr.f32.gmra.mxu0 %v510
    %v645 = vpop.f32.mrf.mxu0
    %v646 = vadd.f32 0.0, %v645
    %v647 = vpop.f32.mrf.mxu0
    %648 = vmatprep.mubr.f32.mxu0 0.0
    %649 = vmatmul.mubr.f32.gmra.mxu0 %v513
    %v650 = vpop.f32.mrf.mxu0
    %v651 = vadd.f32 0.0, %v650
    %v652 = vpop.f32.mrf.mxu0
    %653 = vmatprep.mubr.f32.mxu0 0.0
    %654 = vmatmul.mubr.f32.gmra.mxu0 %v516
    %v655 = vpop.f32.mrf.mxu0
    %v656 = vadd.f32 0.0, %v655
    %v657 = vpop.f32.mrf.mxu0
    %658 = vmatprep.mubr.f32.mxu0 0.0
    %659 = vmatmul.mubr.f32.gmra.mxu0 %v519
    %v660 = vpop.f32.mrf.mxu0
    %v661 = vadd.f32 0.0, %v660
    %v662 = vpop.f32.mrf.mxu0
    %663 = vmatprep.mubr.f32.mxu0 0.0
    %664 = vmatmul.mubr.f32.gmra.mxu0 %v522
    %v665 = vpop.f32.mrf.mxu0
    %v666 = vadd.f32 0.0, %v665
    %v667 = vpop.f32.mrf.mxu0
    %668 = vmatprep.mubr.f32.mxu0 0.0
    %669 = vmatmul.mubr.f32.gmra.mxu0 %v525
    %v670 = vpop.f32.mrf.mxu0
    %v671 = vadd.f32 0.0, %v670
    %v672 = vpop.f32.mrf.mxu0
    %673 = vmatprep.mubr.f32.mxu0 0.0
    %674 = vmatmul.mubr.f32.gmra.mxu0 %v528
    %v675 = vpop.f32.mrf.mxu0
    %v676 = vadd.f32 0.0, %v675
    %v677 = vpop.f32.mrf.mxu0
    %678 = vmatprep.mubr.f32.mxu0 0.0
    %679 = vmatmul.mubr.f32.gmra.mxu0 %v531
    %v680 = vpop.f32.mrf.mxu0
    %v681 = vadd.f32 0.0, %v680
    %v682 = vpop.f32.mrf.mxu0
    %683 = vmatprep.mubr.f32.mxu0 0.0
    %684 = vmatmul.mubr.f32.gmra.mxu0 %v534
    %v685 = vpop.f32.mrf.mxu0
    %v686 = vadd.f32 0.0, %v685
    %v687 = vpop.f32.mrf.mxu0
    %688 = vmatprep.mubr.f32.mxu0 0.0
    %689 = vmatmul.mubr.f32.gmra.mxu0 %v537
    %v690 = vpop.f32.mrf.mxu0
    %v691 = vadd.f32 0.0, %v690
    %v692 = vpop.f32.mrf.mxu0
    %693 = vmatprep.mubr.f32.mxu0 0.0
    %694 = vmatmul.mubr.f32.gmra.mxu0 %v540
    %v695 = vpop.f32.mrf.mxu0
    %v696 = vadd.f32 0.0, %v695
    %v697 = vpop.f32.mrf.mxu0
    %698 = vmatprep.mubr.f32.mxu0 0.0
    %699 = vmatmul.mubr.f32.gmra.mxu0 %v543
    %v700 = vpop.f32.mrf.mxu0
    %v701 = vadd.f32 0.0, %v700
    %v702 = vpop.f32.mrf.mxu0
    %703 = vmatprep.mubr.f32.mxu0 0.0
    %704 = vmatmul.mubr.f32.gmra.mxu0 %v546
    %v705 = vpop.f32.mrf.mxu0
    %v706 = vadd.f32 0.0, %v705
    %v707 = vpop.f32.mrf.mxu0
    %708 = vmatprep.mubr.f32.mxu0 0.0
    %709 = vmatmul.mubr.f32.gmra.mxu0 %v549
    %v710 = vpop.f32.mrf.mxu0
    %v711 = vadd.f32 0.0, %v710
    %v712 = vpop.f32.mrf.mxu0
    %713 = vmatprep.mubr.f32.mxu0 0.0
    %714 = vmatmul.mubr.f32.gmra.mxu0 %v552
    %v715 = vpop.f32.mrf.mxu0
    %v716 = vadd.f32 0.0, %v715
    %v717 = vpop.f32.mrf.mxu0
    %718 = vdwg.mxu0
    %v720 = vsel %vm493, %v293, 0
    %v723 = vsel %vm493, %v298, 0
    %v726 = vsel %vm493, %v303, 0
    %v729 = vsel %vm493, %v308, 0
    %731 = vmatprep.subr.mxu0 0.0
    %732 = vmatpush1.msra.mxu0 0.0
    %733 = vmatprep.subr.mxu0 0.0
    %734 = vmatpush1.msra.mxu0 0.0
    %735 = vmatprep.subr.mxu0 0.0
    %736 = vmatpush1.msra.mxu0 0.0
    %737 = vmatprep.subr.mxu0 0.0
    %738 = vmatpush1.msra.mxu0 0.0
    %739 = vmatprep.subr.mxu0 0.0
    %740 = vmatpush1.msra.mxu0 0.0
    %741 = vmatprep.subr.mxu0 0.0
    %742 = vmatpush1.msra.mxu0 0.0
    %743 = vmatprep.subr.mxu0 0.0
    %744 = vmatpush1.msra.mxu0 0.0
    %745 = vmatprep.subr.mxu0 0.0
    %746 = vmatpush1.msra.mxu0 0.0
    %747 = vmatprep.subr.mxu0 0.0
    %748 = vmatpush1.msra.mxu0 %v476
    %749 = vmatprep.subr.mxu0 0.0
    %750 = vmatpush1.msra.mxu0 %v475
    %751 = vmatprep.subr.mxu0 0.0
    %752 = vmatpush1.msra.mxu0 %v474
    %753 = vmatprep.subr.mxu0 0.0
    %754 = vmatpush1.msra.mxu0 %v473
    %755 = vmatprep.subr.mxu0 0.0
    %756 = vmatpush1.msra.mxu0 %v472
    %757 = vmatprep.subr.mxu0 0.0
    %758 = vmatpush1.msra.mxu0 %v471
    %759 = vmatprep.subr.mxu0 0.0
    %760 = vmatpush1.msra.mxu0 %v470
    %761 = vmatprep.subr.mxu0 0.0
    %762 = vmatpush1.msra.mxu0 %v469
    %763 = vmatprep.subr.mxu0 0.0
    %764 = vmatpush2.msra.mxu0 0.0
    %765 = vmatprep.subr.mxu0 0.0
    %766 = vmatpush2.msra.mxu0 0.0
    %767 = vmatprep.subr.mxu0 0.0
    %768 = vmatpush2.msra.mxu0 0.0
    %769 = vmatprep.subr.mxu0 0.0
    %770 = vmatpush2.msra.mxu0 0.0
    %771 = vmatprep.subr.mxu0 0.0
    %772 = vmatpush2.msra.mxu0 0.0
    %773 = vmatprep.subr.mxu0 0.0
    %774 = vmatpush2.msra.mxu0 0.0
    %775 = vmatprep.subr.mxu0 0.0
    %776 = vmatpush2.msra.mxu0 0.0
    %777 = vmatprep.subr.mxu0 0.0
    %778 = vmatpush2.msra.mxu0 0.0
    %779 = vmatprep.subr.mxu0 0.0
    %780 = vmatpush2.msra.mxu0 0.0
    %781 = vmatprep.subr.mxu0 0.0
    %782 = vmatpush2.msra.mxu0 0.0
    %783 = vmatprep.subr.mxu0 0.0
    %784 = vmatpush2.msra.mxu0 0.0
    %785 = vmatprep.subr.mxu0 0.0
    %786 = vmatpush2.msra.mxu0 0.0
    %787 = vmatprep.subr.mxu0 0.0
    %788 = vmatpush2.msra.mxu0 0.0
    %789 = vmatprep.subr.mxu0 0.0
    %790 = vmatpush2.msra.mxu0 0.0
    %791 = vmatprep.subr.mxu0 0.0
    %792 = vmatpush2.msra.mxu0 0.0
    %793 = vmatprep.subr.mxu0 0.0
    %794 = vmatpush2.msra.mxu0 0.0
    %795 = vmatprep.mubr.f32.mxu0 0.0
    %796 = vmatmul.mubr.f32.gmra.mxu0 %v720
    %v797 = vpop.f32.mrf.mxu0
    %v798 = vadd.f32 0.0, %v797
    %v799 = vpop.f32.mrf.mxu0
    %800 = vmatprep.mubr.f32.mxu0 0.0
    %801 = vmatmul.mubr.f32.gmra.mxu0 %v723
    %v802 = vpop.f32.mrf.mxu0
    %v803 = vadd.f32 0.0, %v802
    %v804 = vpop.f32.mrf.mxu0
    %805 = vmatprep.mubr.f32.mxu0 0.0
    %806 = vmatmul.mubr.f32.gmra.mxu0 %v726
    %v807 = vpop.f32.mrf.mxu0
    %v808 = vadd.f32 0.0, %v807
    %v809 = vpop.f32.mrf.mxu0
    %810 = vmatprep.mubr.f32.mxu0 0.0
    %811 = vmatmul.mubr.f32.gmra.mxu0 %v729
    %v812 = vpop.f32.mrf.mxu0
    %v813 = vadd.f32 0.0, %v812
    %v814 = vpop.f32.mrf.mxu0
    %815 = vdwg.mxu0
    %v817 = vsel %vm493, %v447, 0
    %v820 = vsel %vm493, %v452, 0
    %v823 = vsel %vm493, %v457, 0
    %v826 = vsel %vm493, %v462, 0
    %828 = vmatprep.subr.mxu0 0.0
    %829 = vmatpush1.msra.mxu0 0.0
    %830 = vmatprep.subr.mxu0 0.0
    %831 = vmatpush1.msra.mxu0 0.0
    %832 = vmatprep.subr.mxu0 0.0
    %833 = vmatpush1.msra.mxu0 0.0
    %834 = vmatprep.subr.mxu0 0.0
    %835 = vmatpush1.msra.mxu0 0.0
    %836 = vmatprep.subr.mxu0 0.0
    %837 = vmatpush1.msra.mxu0 0.0
    %838 = vmatprep.subr.mxu0 0.0
    %839 = vmatpush1.msra.mxu0 0.0
    %840 = vmatprep.subr.mxu0 0.0
    %841 = vmatpush1.msra.mxu0 0.0
    %842 = vmatprep.subr.mxu0 0.0
    %843 = vmatpush1.msra.mxu0 0.0
    %844 = vmatprep.subr.mxu0 0.0
    %845 = vmatpush1.msra.mxu0 %v476
    %846 = vmatprep.subr.mxu0 0.0
    %847 = vmatpush1.msra.mxu0 %v475
    %848 = vmatprep.subr.mxu0 0.0
    %849 = vmatpush1.msra.mxu0 %v474
    %850 = vmatprep.subr.mxu0 0.0
    %851 = vmatpush1.msra.mxu0 %v473
    %852 = vmatprep.subr.mxu0 0.0
    %853 = vmatpush1.msra.mxu0 %v472
    %854 = vmatprep.subr.mxu0 0.0
    %855 = vmatpush1.msra.mxu0 %v471
    %856 = vmatprep.subr.mxu0 0.0
    %857 = vmatpush1.msra.mxu0 %v470
    %858 = vmatprep.subr.mxu0 0.0
    %859 = vmatpush1.msra.mxu0 %v469
    %860 = vmatprep.subr.mxu0 0.0
    %861 = vmatpush2.msra.mxu0 0.0
    %862 = vmatprep.subr.mxu0 0.0
    %863 = vmatpush2.msra.mxu0 0.0
    %864 = vmatprep.subr.mxu0 0.0
    %865 = vmatpush2.msra.mxu0 0.0
    %866 = vmatprep.subr.mxu0 0.0
    %867 = vmatpush2.msra.mxu0 0.0
    %868 = vmatprep.subr.mxu0 0.0
    %869 = vmatpush2.msra.mxu0 0.0
    %870 = vmatprep.subr.mxu0 0.0
    %871 = vmatpush2.msra.mxu0 0.0
    %872 = vmatprep.subr.mxu0 0.0
    %873 = vmatpush2.msra.mxu0 0.0
    %874 = vmatprep.subr.mxu0 0.0
    %875 = vmatpush2.msra.mxu0 0.0
    %876 = vmatprep.subr.mxu0 0.0
    %877 = vmatpush2.msra.mxu0 0.0
    %878 = vmatprep.subr.mxu0 0.0
    %879 = vmatpush2.msra.mxu0 0.0
    %880 = vmatprep.subr.mxu0 0.0
    %881 = vmatpush2.msra.mxu0 0.0
    %882 = vmatprep.subr.mxu0 0.0
    %883 = vmatpush2.msra.mxu0 0.0
    %884 = vmatprep.subr.mxu0 0.0
    %885 = vmatpush2.msra.mxu0 0.0
    %886 = vmatprep.subr.mxu0 0.0
    %887 = vmatpush2.msra.mxu0 0.0
    %888 = vmatprep.subr.mxu0 0.0
    %889 = vmatpush2.msra.mxu0 0.0
    %890 = vmatprep.subr.mxu0 0.0
    %891 = vmatpush2.msra.mxu0 0.0
    %892 = vmatprep.mubr.f32.mxu0 0.0
    %893 = vmatmul.mubr.f32.gmra.mxu0 %v817
    %v894 = vpop.f32.mrf.mxu0
    %v895 = vadd.f32 0.0, %v894
    %v896 = vpop.f32.mrf.mxu0
    %897 = vmatprep.mubr.f32.mxu0 0.0
    %898 = vmatmul.mubr.f32.gmra.mxu0 %v820
    %v899 = vpop.f32.mrf.mxu0
    %v900 = vadd.f32 0.0, %v899
    %v901 = vpop.f32.mrf.mxu0
    %902 = vmatprep.mubr.f32.mxu0 0.0
    %903 = vmatmul.mubr.f32.gmra.mxu0 %v823
    %v904 = vpop.f32.mrf.mxu0
    %v905 = vadd.f32 0.0, %v904
    %v906 = vpop.f32.mrf.mxu0
    %907 = vmatprep.mubr.f32.mxu0 0.0
    %908 = vmatmul.mubr.f32.gmra.mxu0 %v826
    %v909 = vpop.f32.mrf.mxu0
    %v910 = vadd.f32 0.0, %v909
    %v911 = vpop.f32.mrf.mxu0
    %912 = vdwg.mxu0
    %v914 = vsel %vm213, %v465, 0
    %v917 = vsel %vm213, %v466, 0
    %v920 = vsel %vm213, %v467, 0
    %v923 = vsel %vm213, %v468, 0
    %925 = vmatprep.subr.mxu0 0.0
    %926 = vmatpush1.msra.mxu0 0.0
    %927 = vmatprep.subr.mxu0 0.0
    %928 = vmatpush1.msra.mxu0 0.0
    %929 = vmatprep.subr.mxu0 0.0
    %930 = vmatpush1.msra.mxu0 0.0
    %931 = vmatprep.subr.mxu0 0.0
    %932 = vmatpush1.msra.mxu0 0.0
    %933 = vmatprep.subr.mxu0 0.0
    %934 = vmatpush1.msra.mxu0 0.0
    %935 = vmatprep.subr.mxu0 0.0
    %936 = vmatpush1.msra.mxu0 0.0
    %937 = vmatprep.subr.mxu0 0.0
    %938 = vmatpush1.msra.mxu0 0.0
    %939 = vmatprep.subr.mxu0 0.0
    %940 = vmatpush1.msra.mxu0 0.0
    %941 = vmatprep.subr.mxu0 0.0
    %942 = vmatpush1.msra.mxu0 0.0
    %943 = vmatprep.subr.mxu0 0.0
    %944 = vmatpush1.msra.mxu0 0.0
    %945 = vmatprep.subr.mxu0 0.0
    %946 = vmatpush1.msra.mxu0 0.0
    %947 = vmatprep.subr.mxu0 0.0
    %948 = vmatpush1.msra.mxu0 0.0
    %949 = vmatprep.subr.mxu0 0.0
    %950 = vmatpush1.msra.mxu0 %v140
    %951 = vmatprep.subr.mxu0 0.0
    %952 = vmatpush1.msra.mxu0 %v139
    %953 = vmatprep.subr.mxu0 0.0
    %954 = vmatpush1.msra.mxu0 %v138
    %955 = vmatprep.subr.mxu0 0.0
    %956 = vmatpush1.msra.mxu0 %v137
    %957 = vmatprep.subr.mxu0 0.0
    %958 = vmatpush2.msra.mxu0 0.0
    %959 = vmatprep.subr.mxu0 0.0
    %960 = vmatpush2.msra.mxu0 0.0
    %961 = vmatprep.subr.mxu0 0.0
    %962 = vmatpush2.msra.mxu0 0.0
    %963 = vmatprep.subr.mxu0 0.0
    %964 = vmatpush2.msra.mxu0 0.0
    %965 = vmatprep.subr.mxu0 0.0
    %966 = vmatpush2.msra.mxu0 0.0
    %967 = vmatprep.subr.mxu0 0.0
    %968 = vmatpush2.msra.mxu0 0.0
    %969 = vmatprep.subr.mxu0 0.0
    %970 = vmatpush2.msra.mxu0 0.0
    %971 = vmatprep.subr.mxu0 0.0
    %972 = vmatpush2.msra.mxu0 0.0
    %973 = vmatprep.subr.mxu0 0.0
    %974 = vmatpush2.msra.mxu0 0.0
    %975 = vmatprep.subr.mxu0 0.0
    %976 = vmatpush2.msra.mxu0 0.0
    %977 = vmatprep.subr.mxu0 0.0
    %978 = vmatpush2.msra.mxu0 0.0
    %979 = vmatprep.subr.mxu0 0.0
    %980 = vmatpush2.msra.mxu0 0.0
    %981 = vmatprep.subr.mxu0 0.0
    %982 = vmatpush2.msra.mxu0 0.0
    %983 = vmatprep.subr.mxu0 0.0
    %984 = vmatpush2.msra.mxu0 0.0
    %985 = vmatprep.subr.mxu0 0.0
    %986 = vmatpush2.msra.mxu0 0.0
    %987 = vmatprep.subr.mxu0 0.0
    %988 = vmatpush2.msra.mxu0 0.0
    %989 = vmatprep.mubr.f32.mxu0 0.0
    %990 = vmatmul.mubr.f32.gmra.mxu0 %v914
    %v991 = vpop.f32.mrf.mxu0
    %v992 = vadd.f32 0.0, %v991
    %v993 = vpop.f32.mrf.mxu0
    %994 = vmatprep.mubr.f32.mxu0 0.0
    %995 = vmatmul.mubr.f32.gmra.mxu0 %v917
    %v996 = vpop.f32.mrf.mxu0
    %v997 = vadd.f32 0.0, %v996
    %v998 = vpop.f32.mrf.mxu0
    %999 = vmatprep.mubr.f32.mxu0 0.0
    %1000 = vmatmul.mubr.f32.gmra.mxu0 %v920
    %v1001 = vpop.f32.mrf.mxu0
    %v1002 = vadd.f32 0.0, %v1001
    %v1003 = vpop.f32.mrf.mxu0
    %1004 = vmatprep.mubr.f32.mxu0 0.0
    %1005 = vmatmul.mubr.f32.gmra.mxu0 %v923
    %v1006 = vpop.f32.mrf.mxu0
    %v1007 = vadd.f32 0.0, %v1006
    %v1008 = vpop.f32.mrf.mxu0
    %1009 = vdwg.mxu0
    %1010 = vmatprep.subr.mxu0 0.0
    %1011 = vmatpush1.msra.mxu0 0.0
    %1012 = vmatprep.subr.mxu0 0.0
    %1013 = vmatpush1.msra.mxu0 0.0
    %1014 = vmatprep.subr.mxu0 0.0
    %1015 = vmatpush1.msra.mxu0 0.0
    %1016 = vmatprep.subr.mxu0 0.0
    %1017 = vmatpush1.msra.mxu0 0.0
    %1018 = vmatprep.subr.mxu0 0.0
    %1019 = vmatpush1.msra.mxu0 0.0
    %1020 = vmatprep.subr.mxu0 0.0
    %1021 = vmatpush1.msra.mxu0 0.0
    %1022 = vmatprep.subr.mxu0 0.0
    %1023 = vmatpush1.msra.mxu0 0.0
    %1024 = vmatprep.subr.mxu0 0.0
    %1025 = vmatpush1.msra.mxu0 0.0
    %1026 = vmatprep.subr.mxu0 0.0
    %1027 = vmatpush1.msra.mxu0 0.0
    %1028 = vmatprep.subr.mxu0 0.0
    %1029 = vmatpush1.msra.mxu0 0.0
    %1030 = vmatprep.subr.mxu0 0.0
    %1031 = vmatpush1.msra.mxu0 0.0
    %1032 = vmatprep.subr.mxu0 0.0
    %1033 = vmatpush1.msra.mxu0 0.0
    %1034 = vmatprep.subr.mxu0 0.0
    %1035 = vmatpush1.msra.mxu0 %v144
    %1036 = vmatprep.subr.mxu0 0.0
    %1037 = vmatpush1.msra.mxu0 %v143
    %1038 = vmatprep.subr.mxu0 0.0
    %1039 = vmatpush1.msra.mxu0 %v142
    %1040 = vmatprep.subr.mxu0 0.0
    %1041 = vmatpush1.msra.mxu0 %v141
    %1042 = vmatprep.subr.mxu0 0.0
    %1043 = vmatpush2.msra.mxu0 0.0
    %1044 = vmatprep.subr.mxu0 0.0
    %1045 = vmatpush2.msra.mxu0 0.0
    %1046 = vmatprep.subr.mxu0 0.0
    %1047 = vmatpush2.msra.mxu0 0.0
    %1048 = vmatprep.subr.mxu0 0.0
    %1049 = vmatpush2.msra.mxu0 0.0
    %1050 = vmatprep.subr.mxu0 0.0
    %1051 = vmatpush2.msra.mxu0 0.0
    %1052 = vmatprep.subr.mxu0 0.0
    %1053 = vmatpush2.msra.mxu0 0.0
    %1054 = vmatprep.subr.mxu0 0.0
    %1055 = vmatpush2.msra.mxu0 0.0
    %1056 = vmatprep.subr.mxu0 0.0
    %1057 = vmatpush2.msra.mxu0 0.0
    %1058 = vmatprep.subr.mxu0 0.0
    %1059 = vmatpush2.msra.mxu0 0.0
    %1060 = vmatprep.subr.mxu0 0.0
    %1061 = vmatpush2.msra.mxu0 0.0
    %1062 = vmatprep.subr.mxu0 0.0
    %1063 = vmatpush2.msra.mxu0 0.0
    %1064 = vmatprep.subr.mxu0 0.0
    %1065 = vmatpush2.msra.mxu0 0.0
    %1066 = vmatprep.subr.mxu0 0.0
    %1067 = vmatpush2.msra.mxu0 0.0
    %1068 = vmatprep.subr.mxu0 0.0
    %1069 = vmatpush2.msra.mxu0 0.0
    %1070 = vmatprep.subr.mxu0 0.0
    %1071 = vmatpush2.msra.mxu0 0.0
    %1072 = vmatprep.subr.mxu0 0.0
    %1073 = vmatpush2.msra.mxu0 0.0
    %1074 = vmatprep.mubr.f32.mxu0 0.0
    %1075 = vmatmul.mubr.f32.gmra.mxu0 %v914
    %v1076 = vpop.f32.mrf.mxu0
    %v1077 = vadd.f32 0.0, %v1076
    %v1078 = vpop.f32.mrf.mxu0
    %1079 = vmatprep.mubr.f32.mxu0 0.0
    %1080 = vmatmul.mubr.f32.gmra.mxu0 %v917
    %v1081 = vpop.f32.mrf.mxu0
    %v1082 = vadd.f32 0.0, %v1081
    %v1083 = vpop.f32.mrf.mxu0
    %1084 = vmatprep.mubr.f32.mxu0 0.0
    %1085 = vmatmul.mubr.f32.gmra.mxu0 %v920
    %v1086 = vpop.f32.mrf.mxu0
    %v1087 = vadd.f32 0.0, %v1086
    %v1088 = vpop.f32.mrf.mxu0
    %1089 = vmatprep.mubr.f32.mxu0 0.0
    %1090 = vmatmul.mubr.f32.gmra.mxu0 %v923
    %v1091 = vpop.f32.mrf.mxu0
    %v1092 = vadd.f32 0.0, %v1091
    %v1093 = vpop.f32.mrf.mxu0
    %1094 = vdwg.mxu0
    %1095 = vmatprep.subr.mxu0 0.0
    %1096 = vmatpush1.msra.mxu0 0.0
    %1097 = vmatprep.subr.mxu0 0.0
    %1098 = vmatpush1.msra.mxu0 0.0
    %1099 = vmatprep.subr.mxu0 0.0
    %1100 = vmatpush1.msra.mxu0 0.0
    %1101 = vmatprep.subr.mxu0 0.0
    %1102 = vmatpush1.msra.mxu0 0.0
    %1103 = vmatprep.subr.mxu0 0.0
    %1104 = vmatpush1.msra.mxu0 0.0
    %1105 = vmatprep.subr.mxu0 0.0
    %1106 = vmatpush1.msra.mxu0 0.0
    %1107 = vmatprep.subr.mxu0 0.0
    %1108 = vmatpush1.msra.mxu0 0.0
    %1109 = vmatprep.subr.mxu0 0.0
    %1110 = vmatpush1.msra.mxu0 0.0
    %1111 = vmatprep.subr.mxu0 0.0
    %1112 = vmatpush1.msra.mxu0 0.0
    %1113 = vmatprep.subr.mxu0 0.0
    %1114 = vmatpush1.msra.mxu0 0.0
    %1115 = vmatprep.subr.mxu0 0.0
    %1116 = vmatpush1.msra.mxu0 0.0
    %1117 = vmatprep.subr.mxu0 0.0
    %1118 = vmatpush1.msra.mxu0 0.0
    %1119 = vmatprep.subr.mxu0 0.0
    %1120 = vmatpush1.msra.mxu0 %v148
    %1121 = vmatprep.subr.mxu0 0.0
    %1122 = vmatpush1.msra.mxu0 %v147
    %1123 = vmatprep.subr.mxu0 0.0
    %1124 = vmatpush1.msra.mxu0 %v146
    %1125 = vmatprep.subr.mxu0 0.0
    %1126 = vmatpush1.msra.mxu0 %v145
    %1127 = vmatprep.subr.mxu0 0.0
    %1128 = vmatpush2.msra.mxu0 0.0
    %1129 = vmatprep.subr.mxu0 0.0
    %1130 = vmatpush2.msra.mxu0 0.0
    %1131 = vmatprep.subr.mxu0 0.0
    %1132 = vmatpush2.msra.mxu0 0.0
    %1133 = vmatprep.subr.mxu0 0.0
    %1134 = vmatpush2.msra.mxu0 0.0
    %1135 = vmatprep.subr.mxu0 0.0
    %1136 = vmatpush2.msra.mxu0 0.0
    %1137 = vmatprep.subr.mxu0 0.0
    %1138 = vmatpush2.msra.mxu0 0.0
    %1139 = vmatprep.subr.mxu0 0.0
    %1140 = vmatpush2.msra.mxu0 0.0
    %1141 = vmatprep.subr.mxu0 0.0
    %1142 = vmatpush2.msra.mxu0 0.0
    %1143 = vmatprep.subr.mxu0 0.0
    %1144 = vmatpush2.msra.mxu0 0.0
    %1145 = vmatprep.subr.mxu0 0.0
    %1146 = vmatpush2.msra.mxu0 0.0
    %1147 = vmatprep.subr.mxu0 0.0
    %1148 = vmatpush2.msra.mxu0 0.0
    %1149 = vmatprep.subr.mxu0 0.0
    %1150 = vmatpush2.msra.mxu0 0.0
    %1151 = vmatprep.subr.mxu0 0.0
    %1152 = vmatpush2.msra.mxu0 0.0
    %1153 = vmatprep.subr.mxu0 0.0
    %1154 = vmatpush2.msra.mxu0 0.0
    %1155 = vmatprep.subr.mxu0 0.0
    %1156 = vmatpush2.msra.mxu0 0.0
    %1157 = vmatprep.subr.mxu0 0.0
    %1158 = vmatpush2.msra.mxu0 0.0
    %1159 = vmatprep.mubr.f32.mxu0 0.0
    %1160 = vmatmul.mubr.f32.gmra.mxu0 %v914
    %v1161 = vpop.f32.mrf.mxu0
    %v1162 = vadd.f32 0.0, %v1161
    %v1163 = vpop.f32.mrf.mxu0
    %1164 = vmatprep.mubr.f32.mxu0 0.0
    %1165 = vmatmul.mubr.f32.gmra.mxu0 %v917
    %v1166 = vpop.f32.mrf.mxu0
    %v1167 = vadd.f32 0.0, %v1166
    %v1168 = vpop.f32.mrf.mxu0
    %1169 = vmatprep.mubr.f32.mxu0 0.0
    %1170 = vmatmul.mubr.f32.gmra.mxu0 %v920
    %v1171 = vpop.f32.mrf.mxu0
    %v1172 = vadd.f32 0.0, %v1171
    %v1173 = vpop.f32.mrf.mxu0
    %1174 = vmatprep.mubr.f32.mxu0 0.0
    %1175 = vmatmul.mubr.f32.gmra.mxu0 %v923
    %v1176 = vpop.f32.mrf.mxu0
    %v1177 = vadd.f32 0.0, %v1176
    %v1178 = vpop.f32.mrf.mxu0
    %1179 = vdwg.mxu0
    %1180 = vmatprep.subr.mxu0 0.0
    %1181 = vmatpush1.msra.mxu0 0.0
    %1182 = vmatprep.subr.mxu0 0.0
    %1183 = vmatpush1.msra.mxu0 0.0
    %1184 = vmatprep.subr.mxu0 0.0
    %1185 = vmatpush1.msra.mxu0 0.0
    %1186 = vmatprep.subr.mxu0 0.0
    %1187 = vmatpush1.msra.mxu0 0.0
    %1188 = vmatprep.subr.mxu0 0.0
    %1189 = vmatpush1.msra.mxu0 0.0
    %1190 = vmatprep.subr.mxu0 0.0
    %1191 = vmatpush1.msra.mxu0 0.0
    %1192 = vmatprep.subr.mxu0 0.0
    %1193 = vmatpush1.msra.mxu0 0.0
    %1194 = vmatprep.subr.mxu0 0.0
    %1195 = vmatpush1.msra.mxu0 0.0
    %1196 = vmatprep.subr.mxu0 0.0
    %1197 = vmatpush1.msra.mxu0 0.0
    %1198 = vmatprep.subr.mxu0 0.0
    %1199 = vmatpush1.msra.mxu0 0.0
    %1200 = vmatprep.subr.mxu0 0.0
    %1201 = vmatpush1.msra.mxu0 0.0
    %1202 = vmatprep.subr.mxu0 0.0
    %1203 = vmatpush1.msra.mxu0 0.0
    %1204 = vmatprep.subr.mxu0 0.0
    %1205 = vmatpush1.msra.mxu0 %v152
    %1206 = vmatprep.subr.mxu0 0.0
    %1207 = vmatpush1.msra.mxu0 %v151
    %1208 = vmatprep.subr.mxu0 0.0
    %1209 = vmatpush1.msra.mxu0 %v150
    %1210 = vmatprep.subr.mxu0 0.0
    %1211 = vmatpush1.msra.mxu0 %v149
    %1212 = vmatprep.subr.mxu0 0.0
    %1213 = vmatpush2.msra.mxu0 0.0
    %1214 = vmatprep.subr.mxu0 0.0
    %1215 = vmatpush2.msra.mxu0 0.0
    %1216 = vmatprep.subr.mxu0 0.0
    %1217 = vmatpush2.msra.mxu0 0.0
    %1218 = vmatprep.subr.mxu0 0.0
    %1219 = vmatpush2.msra.mxu0 0.0
    %1220 = vmatprep.subr.mxu0 0.0
    %1221 = vmatpush2.msra.mxu0 0.0
    %1222 = vmatprep.subr.mxu0 0.0
    %1223 = vmatpush2.msra.mxu0 0.0
    %1224 = vmatprep.subr.mxu0 0.0
    %1225 = vmatpush2.msra.mxu0 0.0
    %1226 = vmatprep.subr.mxu0 0.0
    %1227 = vmatpush2.msra.mxu0 0.0
    %1228 = vmatprep.subr.mxu0 0.0
    %1229 = vmatpush2.msra.mxu0 0.0
    %1230 = vmatprep.subr.mxu0 0.0
    %1231 = vmatpush2.msra.mxu0 0.0
    %1232 = vmatprep.subr.mxu0 0.0
    %1233 = vmatpush2.msra.mxu0 0.0
    %1234 = vmatprep.subr.mxu0 0.0
    %1235 = vmatpush2.msra.mxu0 0.0
    %1236 = vmatprep.subr.mxu0 0.0
    %1237 = vmatpush2.msra.mxu0 0.0
    %1238 = vmatprep.subr.mxu0 0.0
    %1239 = vmatpush2.msra.mxu0 0.0
    %1240 = vmatprep.subr.mxu0 0.0
    %1241 = vmatpush2.msra.mxu0 0.0
    %1242 = vmatprep.subr.mxu0 0.0
    %1243 = vmatpush2.msra.mxu0 0.0
    %1244 = vmatprep.mubr.f32.mxu0 0.0
    %1245 = vmatmul.mubr.f32.gmra.mxu0 %v914
    %v1246 = vpop.f32.mrf.mxu0
    %v1247 = vadd.f32 0.0, %v1246
    %v1248 = vpop.f32.mrf.mxu0
    %1249 = vmatprep.mubr.f32.mxu0 0.0
    %1250 = vmatmul.mubr.f32.gmra.mxu0 %v917
    %v1251 = vpop.f32.mrf.mxu0
    %v1252 = vadd.f32 0.0, %v1251
    %v1253 = vpop.f32.mrf.mxu0
    %1254 = vmatprep.mubr.f32.mxu0 0.0
    %1255 = vmatmul.mubr.f32.gmra.mxu0 %v920
    %v1256 = vpop.f32.mrf.mxu0
    %v1257 = vadd.f32 0.0, %v1256
    %v1258 = vpop.f32.mrf.mxu0
    %1259 = vmatprep.mubr.f32.mxu0 0.0
    %1260 = vmatmul.mubr.f32.gmra.mxu0 %v923
    %v1261 = vpop.f32.mrf.mxu0
    %v1262 = vadd.f32 0.0, %v1261
    %v1263 = vpop.f32.mrf.mxu0
    %1264 = vdwg.mxu0
    %1265 = vmatprep.subr.mxu0 0.0
    %1266 = vmatpush1.msra.mxu0 0.0
    %1267 = vmatprep.subr.mxu0 0.0
    %1268 = vmatpush1.msra.mxu0 0.0
    %1269 = vmatprep.subr.mxu0 0.0
    %1270 = vmatpush1.msra.mxu0 0.0
    %1271 = vmatprep.subr.mxu0 0.0
    %1272 = vmatpush1.msra.mxu0 0.0
    %1273 = vmatprep.subr.mxu0 0.0
    %1274 = vmatpush1.msra.mxu0 0.0
    %1275 = vmatprep.subr.mxu0 0.0
    %1276 = vmatpush1.msra.mxu0 0.0
    %1277 = vmatprep.subr.mxu0 0.0
    %1278 = vmatpush1.msra.mxu0 0.0
    %1279 = vmatprep.subr.mxu0 0.0
    %1280 = vmatpush1.msra.mxu0 0.0
    %1281 = vmatprep.subr.mxu0 0.0
    %1282 = vmatpush1.msra.mxu0 0.0
    %1283 = vmatprep.subr.mxu0 0.0
    %1284 = vmatpush1.msra.mxu0 0.0
    %1285 = vmatprep.subr.mxu0 0.0
    %1286 = vmatpush1.msra.mxu0 0.0
    %1287 = vmatprep.subr.mxu0 0.0
    %1288 = vmatpush1.msra.mxu0 0.0
    %1289 = vmatprep.subr.mxu0 0.0
    %1290 = vmatpush1.msra.mxu0 %v156
    %1291 = vmatprep.subr.mxu0 0.0
    %1292 = vmatpush1.msra.mxu0 %v155
    %1293 = vmatprep.subr.mxu0 0.0
    %1294 = vmatpush1.msra.mxu0 %v154
    %1295 = vmatprep.subr.mxu0 0.0
    %1296 = vmatpush1.msra.mxu0 %v153
    %1297 = vmatprep.subr.mxu0 0.0
    %1298 = vmatpush2.msra.mxu0 0.0
    %1299 = vmatprep.subr.mxu0 0.0
    %1300 = vmatpush2.msra.mxu0 0.0
    %1301 = vmatprep.subr.mxu0 0.0
    %1302 = vmatpush2.msra.mxu0 0.0
    %1303 = vmatprep.subr.mxu0 0.0
    %1304 = vmatpush2.msra.mxu0 0.0
    %1305 = vmatprep.subr.mxu0 0.0
    %1306 = vmatpush2.msra.mxu0 0.0
    %1307 = vmatprep.subr.mxu0 0.0
    %1308 = vmatpush2.msra.mxu0 0.0
    %1309 = vmatprep.subr.mxu0 0.0
    %1310 = vmatpush2.msra.mxu0 0.0
    %1311 = vmatprep.subr.mxu0 0.0
    %1312 = vmatpush2.msra.mxu0 0.0
    %1313 = vmatprep.subr.mxu0 0.0
    %1314 = vmatpush2.msra.mxu0 0.0
    %1315 = vmatprep.subr.mxu0 0.0
    %1316 = vmatpush2.msra.mxu0 0.0
    %1317 = vmatprep.subr.mxu0 0.0
    %1318 = vmatpush2.msra.mxu0 0.0
    %1319 = vmatprep.subr.mxu0 0.0
    %1320 = vmatpush2.msra.mxu0 0.0
    %1321 = vmatprep.subr.mxu0 0.0
    %1322 = vmatpush2.msra.mxu0 0.0
    %1323 = vmatprep.subr.mxu0 0.0
    %1324 = vmatpush2.msra.mxu0 0.0
    %1325 = vmatprep.subr.mxu0 0.0
    %1326 = vmatpush2.msra.mxu0 0.0
    %1327 = vmatprep.subr.mxu0 0.0
    %1328 = vmatpush2.msra.mxu0 0.0
    %1329 = vmatprep.mubr.f32.mxu0 0.0
    %1330 = vmatmul.mubr.f32.gmra.mxu0 %v914
    %v1331 = vpop.f32.mrf.mxu0
    %v1332 = vadd.f32 0.0, %v1331
    %v1333 = vpop.f32.mrf.mxu0
    %1334 = vmatprep.mubr.f32.mxu0 0.0
    %1335 = vmatmul.mubr.f32.gmra.mxu0 %v917
    %v1336 = vpop.f32.mrf.mxu0
    %v1337 = vadd.f32 0.0, %v1336
    %v1338 = vpop.f32.mrf.mxu0
    %1339 = vmatprep.mubr.f32.mxu0 0.0
    %1340 = vmatmul.mubr.f32.gmra.mxu0 %v920
    %v1341 = vpop.f32.mrf.mxu0
    %v1342 = vadd.f32 0.0, %v1341
    %v1343 = vpop.f32.mrf.mxu0
    %1344 = vmatprep.mubr.f32.mxu0 0.0
    %1345 = vmatmul.mubr.f32.gmra.mxu0 %v923
    %v1346 = vpop.f32.mrf.mxu0
    %v1347 = vadd.f32 0.0, %v1346
    %v1348 = vpop.f32.mrf.mxu0
    %1349 = vdwg.mxu0
    %1350 = vmatprep.subr.mxu0 0.0
    %1351 = vmatpush1.msra.mxu0 0.0
    %1352 = vmatprep.subr.mxu0 0.0
    %1353 = vmatpush1.msra.mxu0 0.0
    %1354 = vmatprep.subr.mxu0 0.0
    %1355 = vmatpush1.msra.mxu0 0.0
    %1356 = vmatprep.subr.mxu0 0.0
    %1357 = vmatpush1.msra.mxu0 0.0
    %1358 = vmatprep.subr.mxu0 0.0
    %1359 = vmatpush1.msra.mxu0 0.0
    %1360 = vmatprep.subr.mxu0 0.0
    %1361 = vmatpush1.msra.mxu0 0.0
    %1362 = vmatprep.subr.mxu0 0.0
    %1363 = vmatpush1.msra.mxu0 0.0
    %1364 = vmatprep.subr.mxu0 0.0
    %1365 = vmatpush1.msra.mxu0 0.0
    %1366 = vmatprep.subr.mxu0 0.0
    %1367 = vmatpush1.msra.mxu0 0.0
    %1368 = vmatprep.subr.mxu0 0.0
    %1369 = vmatpush1.msra.mxu0 0.0
    %1370 = vmatprep.subr.mxu0 0.0
    %1371 = vmatpush1.msra.mxu0 0.0
    %1372 = vmatprep.subr.mxu0 0.0
    %1373 = vmatpush1.msra.mxu0 0.0
    %1374 = vmatprep.subr.mxu0 0.0
    %1375 = vmatpush1.msra.mxu0 %v462
    %1376 = vmatprep.subr.mxu0 0.0
    %1377 = vmatpush1.msra.mxu0 %v457
    %1378 = vmatprep.subr.mxu0 0.0
    %1379 = vmatpush1.msra.mxu0 %v452
    %1380 = vmatprep.subr.mxu0 0.0
    %1381 = vmatpush1.msra.mxu0 %v447
    %1382 = vmatprep.subr.mxu0 0.0
    %1383 = vmatpush2.msra.mxu0 0.0
    %1384 = vmatprep.subr.mxu0 0.0
    %1385 = vmatpush2.msra.mxu0 0.0
    %1386 = vmatprep.subr.mxu0 0.0
    %1387 = vmatpush2.msra.mxu0 0.0
    %1388 = vmatprep.subr.mxu0 0.0
    %1389 = vmatpush2.msra.mxu0 0.0
    %1390 = vmatprep.subr.mxu0 0.0
    %1391 = vmatpush2.msra.mxu0 0.0
    %1392 = vmatprep.subr.mxu0 0.0
    %1393 = vmatpush2.msra.mxu0 0.0
    %1394 = vmatprep.subr.mxu0 0.0
    %1395 = vmatpush2.msra.mxu0 0.0
    %1396 = vmatprep.subr.mxu0 0.0
    %1397 = vmatpush2.msra.mxu0 0.0
    %1398 = vmatprep.subr.mxu0 0.0
    %1399 = vmatpush2.msra.mxu0 0.0
    %1400 = vmatprep.subr.mxu0 0.0
    %1401 = vmatpush2.msra.mxu0 0.0
    %1402 = vmatprep.subr.mxu0 0.0
    %1403 = vmatpush2.msra.mxu0 0.0
    %1404 = vmatprep.subr.mxu0 0.0
    %1405 = vmatpush2.msra.mxu0 0.0
    %1406 = vmatprep.subr.mxu0 0.0
    %1407 = vmatpush2.msra.mxu0 0.0
    %1408 = vmatprep.subr.mxu0 0.0
    %1409 = vmatpush2.msra.mxu0 0.0
    %1410 = vmatprep.subr.mxu0 0.0
    %1411 = vmatpush2.msra.mxu0 0.0
    %1412 = vmatprep.subr.mxu0 0.0
    %1413 = vmatpush2.msra.mxu0 0.0
    %1414 = vmatprep.mubr.f32.mxu0 0.0
    %1415 = vmatmul.mubr.f32.gmra.mxu0 %v914
    %v1416 = vpop.f32.mrf.mxu0
    %v1417 = vadd.f32 0.0, %v1416
    %v1418 = vpop.f32.mrf.mxu0
    %1419 = vmatprep.mubr.f32.mxu0 0.0
    %1420 = vmatmul.mubr.f32.gmra.mxu0 %v917
    %v1421 = vpop.f32.mrf.mxu0
    %v1422 = vadd.f32 0.0, %v1421
    %v1423 = vpop.f32.mrf.mxu0
    %1424 = vmatprep.mubr.f32.mxu0 0.0
    %1425 = vmatmul.mubr.f32.gmra.mxu0 %v920
    %v1426 = vpop.f32.mrf.mxu0
    %v1427 = vadd.f32 0.0, %v1426
    %v1428 = vpop.f32.mrf.mxu0
    %1429 = vmatprep.mubr.f32.mxu0 0.0
    %1430 = vmatmul.mubr.f32.gmra.mxu0 %v923
    %v1431 = vpop.f32.mrf.mxu0
    %v1432 = vadd.f32 0.0, %v1431
    %v1433 = vpop.f32.mrf.mxu0
    %1434 = vdwg.mxu0
    %v1435 = vmul.f32 %v293, %v1332
    %v1436 = vmul.f32 %v298, %v1337
    %v1437 = vmul.f32 %v303, %v1342
    %v1438 = vmul.f32 %v308, %v1347
    %v1439 = vmul.f32 %v447, %v701
    %v1440 = vmul.f32 %v452, %v706
    %v1441 = vmul.f32 %v457, %v711
    %v1442 = vmul.f32 %v462, %v716
    %v1443 = vadd.f32 %v1435, %v1439
    %v1444 = vadd.f32 %v1436, %v1440
    %v1445 = vadd.f32 %v1437, %v1441
    %v1446 = vadd.f32 %v1438, %v1442
    %v1447 = vsub.f32 0.0, %v1443
    %v1448 = vsub.f32 0.0, %v1444
    %v1449 = vsub.f32 0.0, %v1445
    %v1450 = vsub.f32 0.0, %v1446
    %v1451 = vsub.f32 %v798, %v1417
    %v1452 = vsub.f32 %v803, %v1422
    %v1453 = vsub.f32 %v808, %v1427
    %v1454 = vsub.f32 %v813, %v1432
    %v1455 = vmul.f32 %v1451, -0.5
    %v1456 = vmul.f32 %v1452, -0.5
    %v1457 = vmul.f32 %v1453, -0.5
    %v1458 = vmul.f32 %v1454, -0.5
    %1459 = vmatprep.subr.mxu0 0.0
    %1460 = vmatpush1.msra.mxu0 0.0
    %1461 = vmatprep.subr.mxu0 0.0
    %1462 = vmatpush1.msra.mxu0 0.0
    %1463 = vmatprep.subr.mxu0 0.0
    %1464 = vmatpush1.msra.mxu0 0.0
    %1465 = vmatprep.subr.mxu0 0.0
    %1466 = vmatpush1.msra.mxu0 0.0
    %1467 = vmatprep.subr.mxu0 0.0
    %1468 = vmatpush1.msra.mxu0 0.0
    %1469 = vmatprep.subr.mxu0 0.0
    %1470 = vmatpush1.msra.mxu0 0.0
    %1471 = vmatprep.subr.mxu0 0.0
    %1472 = vmatpush1.msra.mxu0 0.0
    %1473 = vmatprep.subr.mxu0 0.0
    %1474 = vmatpush1.msra.mxu0 0.0
    %1475 = vmatprep.subr.mxu0 0.0
    %1476 = vmatpush1.msra.mxu0 0.0
    %1477 = vmatprep.subr.mxu0 0.0
    %1478 = vmatpush1.msra.mxu0 0.0
    %1479 = vmatprep.subr.mxu0 0.0
    %1480 = vmatpush1.msra.mxu0 0.0
    %1481 = vmatprep.subr.mxu0 0.0
    %1482 = vmatpush1.msra.mxu0 0.0
    %1483 = vmatprep.subr.mxu0 0.0
    %1484 = vmatpush1.msra.mxu0 %v308
    %1485 = vmatprep.subr.mxu0 0.0
    %1486 = vmatpush1.msra.mxu0 %v303
    %1487 = vmatprep.subr.mxu0 0.0
    %1488 = vmatpush1.msra.mxu0 %v298
    %1489 = vmatprep.subr.mxu0 0.0
    %1490 = vmatpush1.msra.mxu0 %v293
    %1491 = vmatprep.subr.mxu0 0.0
    %1492 = vmatpush2.msra.mxu0 0.0
    %1493 = vmatprep.subr.mxu0 0.0
    %1494 = vmatpush2.msra.mxu0 0.0
    %1495 = vmatprep.subr.mxu0 0.0
    %1496 = vmatpush2.msra.mxu0 0.0
    %1497 = vmatprep.subr.mxu0 0.0
    %1498 = vmatpush2.msra.mxu0 0.0
    %1499 = vmatprep.subr.mxu0 0.0
    %1500 = vmatpush2.msra.mxu0 0.0
    %1501 = vmatprep.subr.mxu0 0.0
    %1502 = vmatpush2.msra.mxu0 0.0
    %1503 = vmatprep.subr.mxu0 0.0
    %1504 = vmatpush2.msra.mxu0 0.0
    %1505 = vmatprep.subr.mxu0 0.0
    %1506 = vmatpush2.msra.mxu0 0.0
    %1507 = vmatprep.subr.mxu0 0.0
    %1508 = vmatpush2.msra.mxu0 0.0
    %1509 = vmatprep.subr.mxu0 0.0
    %1510 = vmatpush2.msra.mxu0 0.0
    %1511 = vmatprep.subr.mxu0 0.0
    %1512 = vmatpush2.msra.mxu0 0.0
    %1513 = vmatprep.subr.mxu0 0.0
    %1514 = vmatpush2.msra.mxu0 0.0
    %1515 = vmatprep.subr.mxu0 0.0
    %1516 = vmatpush2.msra.mxu0 0.0
    %1517 = vmatprep.subr.mxu0 0.0
    %1518 = vmatpush2.msra.mxu0 0.0
    %1519 = vmatprep.subr.mxu0 0.0
    %1520 = vmatpush2.msra.mxu0 0.0
    %1521 = vmatprep.subr.mxu0 0.0
    %1522 = vmatpush2.msra.mxu0 0.0
    %1523 = vmatprep.mubr.f32.mxu0 0.0
    %1524 = vmatmul.mubr.f32.gmra.mxu0 %v914
    %v1525 = vpop.f32.mrf.mxu0
    %v1526 = vadd.f32 %v895, %v1525
    %v1527 = vpop.f32.mrf.mxu0
    %1528 = vmatprep.mubr.f32.mxu0 0.0
    %1529 = vmatmul.mubr.f32.gmra.mxu0 %v917
    %v1530 = vpop.f32.mrf.mxu0
    %v1531 = vadd.f32 %v900, %v1530
    %v1532 = vpop.f32.mrf.mxu0
    %1533 = vmatprep.mubr.f32.mxu0 0.0
    %1534 = vmatmul.mubr.f32.gmra.mxu0 %v920
    %v1535 = vpop.f32.mrf.mxu0
    %v1536 = vadd.f32 %v905, %v1535
    %v1537 = vpop.f32.mrf.mxu0
    %1538 = vmatprep.mubr.f32.mxu0 0.0
    %1539 = vmatmul.mubr.f32.gmra.mxu0 %v923
    %v1540 = vpop.f32.mrf.mxu0
    %v1541 = vadd.f32 %v910, %v1540
    %v1542 = vpop.f32.mrf.mxu0
    %1543 = vdwg.mxu0
    %v1544 = vadd.f32 %v137, %v149
    %v1545 = vadd.f32 %v138, %v150
    %v1546 = vadd.f32 %v139, %v151
    %v1547 = vadd.f32 %v140, %v152
    %v1548 = vmul.f32 %v153, 0.061
    %v1549 = vmul.f32 %v154, 0.061
    %v1550 = vmul.f32 %v155, 0.061
    %v1551 = vmul.f32 %v156, 0.061
    %v1552 = vsub.f32 0.066, %v1548
    %v1553 = vsub.f32 0.066, %v1549
    %v1554 = vsub.f32 0.066, %v1550
    %v1555 = vsub.f32 0.066, %v1551
    %v1556 = vsub.f32 0.0, %v1552
    %v1557 = vsub.f32 0.0, %v1553
    %v1558 = vsub.f32 0.0, %v1554
    %v1559 = vsub.f32 0.0, %v1555
    %v1560 = vmul.f32 %v153, 0.318
    %v1561 = vmul.f32 %v154, 0.318
    %v1562 = vmul.f32 %v155, 0.318
    %v1563 = vmul.f32 %v156, 0.318
    %v1564 = vadd.f32 %v1560, 0.489
    %v1565 = vadd.f32 %v1561, 0.489
    %v1566 = vadd.f32 %v1562, 0.489
    %v1567 = vadd.f32 %v1563, 0.489
    %v1568 = vmul.f32 %v1564, %v1526
    %v1569 = vmul.f32 %v1565, %v1531
    %v1570 = vmul.f32 %v1566, %v1536
    %v1571 = vmul.f32 %v1567, %v1541
    %v1572 = vadd.f32 %v1556, %v1568
    %v1573 = vadd.f32 %v1557, %v1569
    %v1574 = vadd.f32 %v1558, %v1570
    %v1575 = vadd.f32 %v1559, %v1571
    %v1576 = vmul.f32 %v153, 0.393
    %v1577 = vmul.f32 %v154, 0.393
    %v1578 = vmul.f32 %v155, 0.393
    %v1579 = vmul.f32 %v156, 0.393
    %v1580 = vsub.f32 0.564, %v1576
    %v1581 = vsub.f32 0.564, %v1577
    %v1582 = vsub.f32 0.564, %v1578
    %v1583 = vsub.f32 0.564, %v1579
    %v1584 = vmul.f32 %v1580, %v1544
    %v1585 = vmul.f32 %v1581, %v1545
    %v1586 = vmul.f32 %v1582, %v1546
    %v1587 = vmul.f32 %v1583, %v1547
    %v1588 = vadd.f32 %v1572, %v1584
    %v1589 = vadd.f32 %v1573, %v1585
    %v1590 = vadd.f32 %v1574, %v1586
    %v1591 = vadd.f32 %v1575, %v1587
    %v1592 = vmul.f32 %v153, 0.037
    %v1593 = vmul.f32 %v154, 0.037
    %v1594 = vmul.f32 %v155, 0.037
    %v1595 = vmul.f32 %v156, 0.037
    %v1596 = vsub.f32 0.047, %v1592
    %v1597 = vsub.f32 0.047, %v1593
    %v1598 = vsub.f32 0.047, %v1594
    %v1599 = vsub.f32 0.047, %v1595
    %v1600 = vmul.f32 %v1596, %v1544
    %v1601 = vmul.f32 %v1597, %v1545
    %v1602 = vmul.f32 %v1598, %v1546
    %v1603 = vmul.f32 %v1599, %v1547
    %v1604 = vadd.f32 %v141, %v145
    %v1605 = vadd.f32 %v142, %v146
    %v1606 = vadd.f32 %v143, %v147
    %v1607 = vadd.f32 %v144, %v148
    %v1608 = vsub.f32 %v149, %v137
    %v1609 = vsub.f32 %v150, %v138
    %v1610 = vsub.f32 %v151, %v139
    %v1611 = vsub.f32 %v152, %v140
    %v1612 = vmul.f32 %v1455, %v1604
    %v1613 = vmul.f32 %v1456, %v1605
    %v1614 = vmul.f32 %v1457, %v1606
    %v1615 = vmul.f32 %v1458, %v1607
    %v1616 = vmul.f32 %v1455, %v1608
    %v1617 = vmul.f32 %v1456, %v1609
    %v1618 = vmul.f32 %v1457, %v1610
    %v1619 = vmul.f32 %v1458, %v1611
    %v1620 = vsub.f32 0.0, %v1455
    %v1621 = vsub.f32 0.0, %v1456
    %v1622 = vsub.f32 0.0, %v1457
    %v1623 = vsub.f32 0.0, %v1458
    %v1624 = vmul.f32 %v1620, %v1604
    %v1625 = vmul.f32 %v1621, %v1605
    %v1626 = vmul.f32 %v1622, %v1606
    %v1627 = vmul.f32 %v1623, %v1607
    %v1628 = vld [vmem:[#allocation12] sm:$0xff]
    %v1629 = vld [vmem:[#allocation12 + $0x8] sm:$0xff]
    %v1630 = vld [vmem:[#allocation12 + $0x10] sm:$0xff]
    %v1631 = vld [vmem:[#allocation12 + $0x18] sm:$0xff]
    %v1632 = vmul.f32 %v293, %v992
    %v1633 = vmul.f32 %v298, %v997
    %v1634 = vmul.f32 %v303, %v1002
    %v1635 = vmul.f32 %v308, %v1007
    %v1636 = vmul.f32 %v447, %v621
    %v1637 = vmul.f32 %v452, %v626
    %v1638 = vmul.f32 %v457, %v631
    %v1639 = vmul.f32 %v462, %v636
    %v1640 = vadd.f32 %v1632, %v1636
    %v1641 = vadd.f32 %v1633, %v1637
    %v1642 = vadd.f32 %v1634, %v1638
    %v1643 = vadd.f32 %v1635, %v1639
    %v1644 = vadd.f32 %v1640, %v1612
    %v1645 = vadd.f32 %v1641, %v1613
    %v1646 = vadd.f32 %v1642, %v1614
    %v1647 = vadd.f32 %v1643, %v1615
    %v1648 = vmul.f32 %v1588, %v137
    %v1649 = vmul.f32 %v1589, %v138
    %v1650 = vmul.f32 %v1590, %v139
    %v1651 = vmul.f32 %v1591, %v140
    %v1652 = vadd.f32 %v1648, %v1600
    %v1653 = vadd.f32 %v1649, %v1601
    %v1654 = vadd.f32 %v1650, %v1602
    %v1655 = vadd.f32 %v1651, %v1603
    %v1656 = vsub.f32 %v1652, %v1644
    %v1657 = vsub.f32 %v1653, %v1645
    %v1658 = vsub.f32 %v1654, %v1646
    %v1659 = vsub.f32 %v1655, %v1647
    %v1661 = vsel %vm213, %v1628, 0
    %v1664 = vsel %vm213, %v1629, 0
    %v1667 = vsel %vm213, %v1630, 0
    %v1670 = vsel %vm213, %v1631, 0
    %1672 = vmatprep.subr.mxu0 0.0
    %1673 = vmatpush1.msra.mxu0 0.0
    %1674 = vmatprep.subr.mxu0 0.0
    %1675 = vmatpush1.msra.mxu0 0.0
    %1676 = vmatprep.subr.mxu0 0.0
    %1677 = vmatpush1.msra.mxu0 0.0
    %1678 = vmatprep.subr.mxu0 0.0
    %1679 = vmatpush1.msra.mxu0 0.0
    %1680 = vmatprep.subr.mxu0 0.0
    %1681 = vmatpush1.msra.mxu0 0.0
    %1682 = vmatprep.subr.mxu0 0.0
    %1683 = vmatpush1.msra.mxu0 0.0
    %1684 = vmatprep.subr.mxu0 0.0
    %1685 = vmatpush1.msra.mxu0 0.0
    %1686 = vmatprep.subr.mxu0 0.0
    %1687 = vmatpush1.msra.mxu0 0.0
    %1688 = vmatprep.subr.mxu0 0.0
    %1689 = vmatpush1.msra.mxu0 0.0
    %1690 = vmatprep.subr.mxu0 0.0
    %1691 = vmatpush1.msra.mxu0 0.0
    %1692 = vmatprep.subr.mxu0 0.0
    %1693 = vmatpush1.msra.mxu0 0.0
    %1694 = vmatprep.subr.mxu0 0.0
    %1695 = vmatpush1.msra.mxu0 0.0
    %1696 = vmatprep.subr.mxu0 0.0
    %1697 = vmatpush1.msra.mxu0 %v1659
    %1698 = vmatprep.subr.mxu0 0.0
    %1699 = vmatpush1.msra.mxu0 %v1658
    %1700 = vmatprep.subr.mxu0 0.0
    %1701 = vmatpush1.msra.mxu0 %v1657
    %1702 = vmatprep.subr.mxu0 0.0
    %1703 = vmatpush1.msra.mxu0 %v1656
    %1704 = vmatprep.subr.mxu0 0.0
    %1705 = vmatpush2.msra.mxu0 0.0
    %1706 = vmatprep.subr.mxu0 0.0
    %1707 = vmatpush2.msra.mxu0 0.0
    %1708 = vmatprep.subr.mxu0 0.0
    %1709 = vmatpush2.msra.mxu0 0.0
    %1710 = vmatprep.subr.mxu0 0.0
    %1711 = vmatpush2.msra.mxu0 0.0
    %1712 = vmatprep.subr.mxu0 0.0
    %1713 = vmatpush2.msra.mxu0 0.0
    %1714 = vmatprep.subr.mxu0 0.0
    %1715 = vmatpush2.msra.mxu0 0.0
    %1716 = vmatprep.subr.mxu0 0.0
    %1717 = vmatpush2.msra.mxu0 0.0
    %1718 = vmatprep.subr.mxu0 0.0
    %1719 = vmatpush2.msra.mxu0 0.0
    %1720 = vmatprep.subr.mxu0 0.0
    %1721 = vmatpush2.msra.mxu0 0.0
    %1722 = vmatprep.subr.mxu0 0.0
    %1723 = vmatpush2.msra.mxu0 0.0
    %1724 = vmatprep.subr.mxu0 0.0
    %1725 = vmatpush2.msra.mxu0 0.0
    %1726 = vmatprep.subr.mxu0 0.0
    %1727 = vmatpush2.msra.mxu0 0.0
    %1728 = vmatprep.subr.mxu0 0.0
    %1729 = vmatpush2.msra.mxu0 0.0
    %1730 = vmatprep.subr.mxu0 0.0
    %1731 = vmatpush2.msra.mxu0 0.0
    %1732 = vmatprep.subr.mxu0 0.0
    %1733 = vmatpush2.msra.mxu0 0.0
    %1734 = vmatprep.subr.mxu0 0.0
    %1735 = vmatpush2.msra.mxu0 0.0
    %1736 = vmatprep.mubr.f32.mxu0 0.0
    %1737 = vmatmul.mubr.f32.gmra.mxu0 %v1661
    %v1738 = vpop.f32.mrf.mxu0
    %v1739 = vadd.f32 0.0, %v1738
    %v1740 = vpop.f32.mrf.mxu0
    %1741 = vmatprep.mubr.f32.mxu0 0.0
    %1742 = vmatmul.mubr.f32.gmra.mxu0 %v1664
    %v1743 = vpop.f32.mrf.mxu0
    %v1744 = vadd.f32 0.0, %v1743
    %v1745 = vpop.f32.mrf.mxu0
    %1746 = vmatprep.mubr.f32.mxu0 0.0
    %1747 = vmatmul.mubr.f32.gmra.mxu0 %v1667
    %v1748 = vpop.f32.mrf.mxu0
    %v1749 = vadd.f32 0.0, %v1748
    %v1750 = vpop.f32.mrf.mxu0
    %1751 = vmatprep.mubr.f32.mxu0 0.0
    %1752 = vmatmul.mubr.f32.gmra.mxu0 %v1670
    %v1753 = vpop.f32.mrf.mxu0
    %v1754 = vadd.f32 0.0, %v1753
    %v1755 = vpop.f32.mrf.mxu0
    %1756 = vdwg.mxu0
    %1757 = vst.msk [vmem:[#allocation17] sm:$0xff] %vm493, %v1739
    %1758 = vst.msk [vmem:[#allocation17 + $0x8] sm:$0xff] %vm493, %v1744
    %1759 = vst.msk [vmem:[#allocation17 + $0x10] sm:$0xff] %vm493, %v1749
    %1760 = vst.msk [vmem:[#allocation17 + $0x18] sm:$0xff] %vm493, %v1754
    %v1761 = vmul.f32 %v293, %v1077
    %v1762 = vmul.f32 %v298, %v1082
    %v1763 = vmul.f32 %v303, %v1087
    %v1764 = vmul.f32 %v308, %v1092
    %v1765 = vmul.f32 %v447, %v641
    %v1766 = vmul.f32 %v452, %v646
    %v1767 = vmul.f32 %v457, %v651
    %v1768 = vmul.f32 %v462, %v656
    %v1769 = vadd.f32 %v1761, %v1765
    %v1770 = vadd.f32 %v1762, %v1766
    %v1771 = vadd.f32 %v1763, %v1767
    %v1772 = vadd.f32 %v1764, %v1768
    %v1773 = vadd.f32 %v1769, %v1616
    %v1774 = vadd.f32 %v1770, %v1617
    %v1775 = vadd.f32 %v1771, %v1618
    %v1776 = vadd.f32 %v1772, %v1619
    %v1777 = vmul.f32 %v1588, %v141
    %v1778 = vmul.f32 %v1589, %v142
    %v1779 = vmul.f32 %v1590, %v143
    %v1780 = vmul.f32 %v1591, %v144
    %v1781 = vsub.f32 %v1777, %v1773
    %v1782 = vsub.f32 %v1778, %v1774
    %v1783 = vsub.f32 %v1779, %v1775
    %v1784 = vsub.f32 %v1780, %v1776
    %1785 = vmatprep.subr.mxu0 0.0
    %1786 = vmatpush1.msra.mxu0 0.0
    %1787 = vmatprep.subr.mxu0 0.0
    %1788 = vmatpush1.msra.mxu0 0.0
    %1789 = vmatprep.subr.mxu0 0.0
    %1790 = vmatpush1.msra.mxu0 0.0
    %1791 = vmatprep.subr.mxu0 0.0
    %1792 = vmatpush1.msra.mxu0 0.0
    %1793 = vmatprep.subr.mxu0 0.0
    %1794 = vmatpush1.msra.mxu0 0.0
    %1795 = vmatprep.subr.mxu0 0.0
    %1796 = vmatpush1.msra.mxu0 0.0
    %1797 = vmatprep.subr.mxu0 0.0
    %1798 = vmatpush1.msra.mxu0 0.0
    %1799 = vmatprep.subr.mxu0 0.0
    %1800 = vmatpush1.msra.mxu0 0.0
    %1801 = vmatprep.subr.mxu0 0.0
    %1802 = vmatpush1.msra.mxu0 0.0
    %1803 = vmatprep.subr.mxu0 0.0
    %1804 = vmatpush1.msra.mxu0 0.0
    %1805 = vmatprep.subr.mxu0 0.0
    %1806 = vmatpush1.msra.mxu0 0.0
    %1807 = vmatprep.subr.mxu0 0.0
    %1808 = vmatpush1.msra.mxu0 0.0
    %1809 = vmatprep.subr.mxu0 0.0
    %1810 = vmatpush1.msra.mxu0 %v1784
    %1811 = vmatprep.subr.mxu0 0.0
    %1812 = vmatpush1.msra.mxu0 %v1783
    %1813 = vmatprep.subr.mxu0 0.0
    %1814 = vmatpush1.msra.mxu0 %v1782
    %1815 = vmatprep.subr.mxu0 0.0
    %1816 = vmatpush1.msra.mxu0 %v1781
    %1817 = vmatprep.subr.mxu0 0.0
    %1818 = vmatpush2.msra.mxu0 0.0
    %1819 = vmatprep.subr.mxu0 0.0
    %1820 = vmatpush2.msra.mxu0 0.0
    %1821 = vmatprep.subr.mxu0 0.0
    %1822 = vmatpush2.msra.mxu0 0.0
    %1823 = vmatprep.subr.mxu0 0.0
    %1824 = vmatpush2.msra.mxu0 0.0
    %1825 = vmatprep.subr.mxu0 0.0
    %1826 = vmatpush2.msra.mxu0 0.0
    %1827 = vmatprep.subr.mxu0 0.0
    %1828 = vmatpush2.msra.mxu0 0.0
    %1829 = vmatprep.subr.mxu0 0.0
    %1830 = vmatpush2.msra.mxu0 0.0
    %1831 = vmatprep.subr.mxu0 0.0
    %1832 = vmatpush2.msra.mxu0 0.0
    %1833 = vmatprep.subr.mxu0 0.0
    %1834 = vmatpush2.msra.mxu0 0.0
    %1835 = vmatprep.subr.mxu0 0.0
    %1836 = vmatpush2.msra.mxu0 0.0
    %1837 = vmatprep.subr.mxu0 0.0
    %1838 = vmatpush2.msra.mxu0 0.0
    %1839 = vmatprep.subr.mxu0 0.0
    %1840 = vmatpush2.msra.mxu0 0.0
    %1841 = vmatprep.subr.mxu0 0.0
    %1842 = vmatpush2.msra.mxu0 0.0
    %1843 = vmatprep.subr.mxu0 0.0
    %1844 = vmatpush2.msra.mxu0 0.0
    %1845 = vmatprep.subr.mxu0 0.0
    %1846 = vmatpush2.msra.mxu0 0.0
    %1847 = vmatprep.subr.mxu0 0.0
    %1848 = vmatpush2.msra.mxu0 0.0
    %1849 = vmatprep.mubr.f32.mxu0 0.0
    %1850 = vmatmul.mubr.f32.gmra.mxu0 %v1661
    %v1851 = vpop.f32.mrf.mxu0
    %v1852 = vadd.f32 0.0, %v1851
    %v1853 = vpop.f32.mrf.mxu0
    %1854 = vmatprep.mubr.f32.mxu0 0.0
    %1855 = vmatmul.mubr.f32.gmra.mxu0 %v1664
    %v1856 = vpop.f32.mrf.mxu0
    %v1857 = vadd.f32 0.0, %v1856
    %v1858 = vpop.f32.mrf.mxu0
    %1859 = vmatprep.mubr.f32.mxu0 0.0
    %1860 = vmatmul.mubr.f32.gmra.mxu0 %v1667
    %v1861 = vpop.f32.mrf.mxu0
    %v1862 = vadd.f32 0.0, %v1861
    %v1863 = vpop.f32.mrf.mxu0
    %1864 = vmatprep.mubr.f32.mxu0 0.0
    %1865 = vmatmul.mubr.f32.gmra.mxu0 %v1670
    %v1866 = vpop.f32.mrf.mxu0
    %v1867 = vadd.f32 0.0, %v1866
    %v1868 = vpop.f32.mrf.mxu0
    %1869 = vdwg.mxu0
    %1870 = vst.msk [vmem:[#allocation17 + $0x20] sm:$0xff] %vm493, %v1852
    %1871 = vst.msk [vmem:[#allocation17 + $0x28] sm:$0xff] %vm493, %v1857
    %1872 = vst.msk [vmem:[#allocation17 + $0x30] sm:$0xff] %vm493, %v1862
    %1873 = vst.msk [vmem:[#allocation17 + $0x38] sm:$0xff] %vm493, %v1867
    %v1874 = vmul.f32 %v293, %v1162
    %v1875 = vmul.f32 %v298, %v1167
    %v1876 = vmul.f32 %v303, %v1172
    %v1877 = vmul.f32 %v308, %v1177
    %v1878 = vmul.f32 %v447, %v661
    %v1879 = vmul.f32 %v452, %v666
    %v1880 = vmul.f32 %v457, %v671
    %v1881 = vmul.f32 %v462, %v676
    %v1882 = vadd.f32 %v1874, %v1878
    %v1883 = vadd.f32 %v1875, %v1879
    %v1884 = vadd.f32 %v1876, %v1880
    %v1885 = vadd.f32 %v1877, %v1881
    %v1886 = vadd.f32 %v1882, %v1616
    %v1887 = vadd.f32 %v1883, %v1617
    %v1888 = vadd.f32 %v1884, %v1618
    %v1889 = vadd.f32 %v1885, %v1619
    %v1890 = vmul.f32 %v1588, %v145
    %v1891 = vmul.f32 %v1589, %v146
    %v1892 = vmul.f32 %v1590, %v147
    %v1893 = vmul.f32 %v1591, %v148
    %v1894 = vsub.f32 %v1890, %v1886
    %v1895 = vsub.f32 %v1891, %v1887
    %v1896 = vsub.f32 %v1892, %v1888
    %v1897 = vsub.f32 %v1893, %v1889
    %1898 = vmatprep.subr.mxu0 0.0
    %1899 = vmatpush1.msra.mxu0 0.0
    %1900 = vmatprep.subr.mxu0 0.0
    %1901 = vmatpush1.msra.mxu0 0.0
    %1902 = vmatprep.subr.mxu0 0.0
    %1903 = vmatpush1.msra.mxu0 0.0
    %1904 = vmatprep.subr.mxu0 0.0
    %1905 = vmatpush1.msra.mxu0 0.0
    %1906 = vmatprep.subr.mxu0 0.0
    %1907 = vmatpush1.msra.mxu0 0.0
    %1908 = vmatprep.subr.mxu0 0.0
    %1909 = vmatpush1.msra.mxu0 0.0
    %1910 = vmatprep.subr.mxu0 0.0
    %1911 = vmatpush1.msra.mxu0 0.0
    %1912 = vmatprep.subr.mxu0 0.0
    %1913 = vmatpush1.msra.mxu0 0.0
    %1914 = vmatprep.subr.mxu0 0.0
    %1915 = vmatpush1.msra.mxu0 0.0
    %1916 = vmatprep.subr.mxu0 0.0
    %1917 = vmatpush1.msra.mxu0 0.0
    %1918 = vmatprep.subr.mxu0 0.0
    %1919 = vmatpush1.msra.mxu0 0.0
    %1920 = vmatprep.subr.mxu0 0.0
    %1921 = vmatpush1.msra.mxu0 0.0
    %1922 = vmatprep.subr.mxu0 0.0
    %1923 = vmatpush1.msra.mxu0 %v1897
    %1924 = vmatprep.subr.mxu0 0.0
    %1925 = vmatpush1.msra.mxu0 %v1896
    %1926 = vmatprep.subr.mxu0 0.0
    %1927 = vmatpush1.msra.mxu0 %v1895
    %1928 = vmatprep.subr.mxu0 0.0
    %1929 = vmatpush1.msra.mxu0 %v1894
    %1930 = vmatprep.subr.mxu0 0.0
    %1931 = vmatpush2.msra.mxu0 0.0
    %1932 = vmatprep.subr.mxu0 0.0
    %1933 = vmatpush2.msra.mxu0 0.0
    %1934 = vmatprep.subr.mxu0 0.0
    %1935 = vmatpush2.msra.mxu0 0.0
    %1936 = vmatprep.subr.mxu0 0.0
    %1937 = vmatpush2.msra.mxu0 0.0
    %1938 = vmatprep.subr.mxu0 0.0
    %1939 = vmatpush2.msra.mxu0 0.0
    %1940 = vmatprep.subr.mxu0 0.0
    %1941 = vmatpush2.msra.mxu0 0.0
    %1942 = vmatprep.subr.mxu0 0.0
    %1943 = vmatpush2.msra.mxu0 0.0
    %1944 = vmatprep.subr.mxu0 0.0
    %1945 = vmatpush2.msra.mxu0 0.0
    %1946 = vmatprep.subr.mxu0 0.0
    %1947 = vmatpush2.msra.mxu0 0.0
    %1948 = vmatprep.subr.mxu0 0.0
    %1949 = vmatpush2.msra.mxu0 0.0
    %1950 = vmatprep.subr.mxu0 0.0
    %1951 = vmatpush2.msra.mxu0 0.0
    %1952 = vmatprep.subr.mxu0 0.0
    %1953 = vmatpush2.msra.mxu0 0.0
    %1954 = vmatprep.subr.mxu0 0.0
    %1955 = vmatpush2.msra.mxu0 0.0
    %1956 = vmatprep.subr.mxu0 0.0
    %1957 = vmatpush2.msra.mxu0 0.0
    %1958 = vmatprep.subr.mxu0 0.0
    %1959 = vmatpush2.msra.mxu0 0.0
    %1960 = vmatprep.subr.mxu0 0.0
    %1961 = vmatpush2.msra.mxu0 0.0
    %1962 = vmatprep.mubr.f32.mxu0 0.0
    %1963 = vmatmul.mubr.f32.gmra.mxu0 %v1661
    %v1964 = vpop.f32.mrf.mxu0
    %v1965 = vadd.f32 0.0, %v1964
    %v1966 = vpop.f32.mrf.mxu0
    %1967 = vmatprep.mubr.f32.mxu0 0.0
    %1968 = vmatmul.mubr.f32.gmra.mxu0 %v1664
    %v1969 = vpop.f32.mrf.mxu0
    %v1970 = vadd.f32 0.0, %v1969
    %v1971 = vpop.f32.mrf.mxu0
    %1972 = vmatprep.mubr.f32.mxu0 0.0
    %1973 = vmatmul.mubr.f32.gmra.mxu0 %v1667
    %v1974 = vpop.f32.mrf.mxu0
    %v1975 = vadd.f32 0.0, %v1974
    %v1976 = vpop.f32.mrf.mxu0
    %1977 = vmatprep.mubr.f32.mxu0 0.0
    %1978 = vmatmul.mubr.f32.gmra.mxu0 %v1670
    %v1979 = vpop.f32.mrf.mxu0
    %v1980 = vadd.f32 0.0, %v1979
    %v1981 = vpop.f32.mrf.mxu0
    %1982 = vdwg.mxu0
    %1983 = vst.msk [vmem:[#allocation17 + $0x40] sm:$0xff] %vm493, %v1965
    %1984 = vst.msk [vmem:[#allocation17 + $0x48] sm:$0xff] %vm493, %v1970
    %1985 = vst.msk [vmem:[#allocation17 + $0x50] sm:$0xff] %vm493, %v1975
    %1986 = vst.msk [vmem:[#allocation17 + $0x58] sm:$0xff] %vm493, %v1980
    %v1987 = vmul.f32 %v293, %v1247
    %v1988 = vmul.f32 %v298, %v1252
    %v1989 = vmul.f32 %v303, %v1257
    %v1990 = vmul.f32 %v308, %v1262
    %v1991 = vmul.f32 %v447, %v681
    %v1992 = vmul.f32 %v452, %v686
    %v1993 = vmul.f32 %v457, %v691
    %v1994 = vmul.f32 %v462, %v696
    %v1995 = vadd.f32 %v1987, %v1991
    %v1996 = vadd.f32 %v1988, %v1992
    %v1997 = vadd.f32 %v1989, %v1993
    %v1998 = vadd.f32 %v1990, %v1994
    %v1999 = vadd.f32 %v1995, %v1624
    %v2000 = vadd.f32 %v1996, %v1625
    %v2001 = vadd.f32 %v1997, %v1626
    %v2002 = vadd.f32 %v1998, %v1627
    %v2003 = vmul.f32 %v1588, %v149
    %v2004 = vmul.f32 %v1589, %v150
    %v2005 = vmul.f32 %v1590, %v151
    %v2006 = vmul.f32 %v1591, %v152
    %v2007 = vsub.f32 %v2003, %v1999
    %v2008 = vsub.f32 %v2004, %v2000
    %v2009 = vsub.f32 %v2005, %v2001
    %v2010 = vsub.f32 %v2006, %v2002
    %2011 = vmatprep.subr.mxu0 0.0
    %2012 = vmatpush1.msra.mxu0 0.0
    %2013 = vmatprep.subr.mxu0 0.0
    %2014 = vmatpush1.msra.mxu0 0.0
    %2015 = vmatprep.subr.mxu0 0.0
    %2016 = vmatpush1.msra.mxu0 0.0
    %2017 = vmatprep.subr.mxu0 0.0
    %2018 = vmatpush1.msra.mxu0 0.0
    %2019 = vmatprep.subr.mxu0 0.0
    %2020 = vmatpush1.msra.mxu0 0.0
    %2021 = vmatprep.subr.mxu0 0.0
    %2022 = vmatpush1.msra.mxu0 0.0
    %2023 = vmatprep.subr.mxu0 0.0
    %2024 = vmatpush1.msra.mxu0 0.0
    %2025 = vmatprep.subr.mxu0 0.0
    %2026 = vmatpush1.msra.mxu0 0.0
    %2027 = vmatprep.subr.mxu0 0.0
    %2028 = vmatpush1.msra.mxu0 0.0
    %2029 = vmatprep.subr.mxu0 0.0
    %2030 = vmatpush1.msra.mxu0 0.0
    %2031 = vmatprep.subr.mxu0 0.0
    %2032 = vmatpush1.msra.mxu0 0.0
    %2033 = vmatprep.subr.mxu0 0.0
    %2034 = vmatpush1.msra.mxu0 0.0
    %2035 = vmatprep.subr.mxu0 0.0
    %2036 = vmatpush1.msra.mxu0 %v2010
    %2037 = vmatprep.subr.mxu0 0.0
    %2038 = vmatpush1.msra.mxu0 %v2009
    %2039 = vmatprep.subr.mxu0 0.0
    %2040 = vmatpush1.msra.mxu0 %v2008
    %2041 = vmatprep.subr.mxu0 0.0
    %2042 = vmatpush1.msra.mxu0 %v2007
    %2043 = vmatprep.subr.mxu0 0.0
    %2044 = vmatpush2.msra.mxu0 0.0
    %2045 = vmatprep.subr.mxu0 0.0
    %2046 = vmatpush2.msra.mxu0 0.0
    %2047 = vmatprep.subr.mxu0 0.0
    %2048 = vmatpush2.msra.mxu0 0.0
    %2049 = vmatprep.subr.mxu0 0.0
    %2050 = vmatpush2.msra.mxu0 0.0
    %2051 = vmatprep.subr.mxu0 0.0
    %2052 = vmatpush2.msra.mxu0 0.0
    %2053 = vmatprep.subr.mxu0 0.0
    %2054 = vmatpush2.msra.mxu0 0.0
    %2055 = vmatprep.subr.mxu0 0.0
    %2056 = vmatpush2.msra.mxu0 0.0
    %2057 = vmatprep.subr.mxu0 0.0
    %2058 = vmatpush2.msra.mxu0 0.0
    %2059 = vmatprep.subr.mxu0 0.0
    %2060 = vmatpush2.msra.mxu0 0.0
    %2061 = vmatprep.subr.mxu0 0.0
    %2062 = vmatpush2.msra.mxu0 0.0
    %2063 = vmatprep.subr.mxu0 0.0
    %2064 = vmatpush2.msra.mxu0 0.0
    %2065 = vmatprep.subr.mxu0 0.0
    %2066 = vmatpush2.msra.mxu0 0.0
    %2067 = vmatprep.subr.mxu0 0.0
    %2068 = vmatpush2.msra.mxu0 0.0
    %2069 = vmatprep.subr.mxu0 0.0
    %2070 = vmatpush2.msra.mxu0 0.0
    %2071 = vmatprep.subr.mxu0 0.0
    %2072 = vmatpush2.msra.mxu0 0.0
    %2073 = vmatprep.subr.mxu0 0.0
    %2074 = vmatpush2.msra.mxu0 0.0
    %2075 = vmatprep.mubr.f32.mxu0 0.0
    %2076 = vmatmul.mubr.f32.gmra.mxu0 %v1661
    %v2077 = vpop.f32.mrf.mxu0
    %v2078 = vadd.f32 0.0, %v2077
    %v2079 = vpop.f32.mrf.mxu0
    %2080 = vmatprep.mubr.f32.mxu0 0.0
    %2081 = vmatmul.mubr.f32.gmra.mxu0 %v1664
    %v2082 = vpop.f32.mrf.mxu0
    %v2083 = vadd.f32 0.0, %v2082
    %v2084 = vpop.f32.mrf.mxu0
    %2085 = vmatprep.mubr.f32.mxu0 0.0
    %2086 = vmatmul.mubr.f32.gmra.mxu0 %v1667
    %v2087 = vpop.f32.mrf.mxu0
    %v2088 = vadd.f32 0.0, %v2087
    %v2089 = vpop.f32.mrf.mxu0
    %2090 = vmatprep.mubr.f32.mxu0 0.0
    %2091 = vmatmul.mubr.f32.gmra.mxu0 %v1670
    %v2092 = vpop.f32.mrf.mxu0
    %v2093 = vadd.f32 0.0, %v2092
    %v2094 = vpop.f32.mrf.mxu0
    %2095 = vdwg.mxu0
    %2096 = vst.msk [vmem:[#allocation17 + $0x60] sm:$0xff] %vm493, %v2078
    %2097 = vst.msk [vmem:[#allocation17 + $0x68] sm:$0xff] %vm493, %v2083
    %2098 = vst.msk [vmem:[#allocation17 + $0x70] sm:$0xff] %vm493, %v2088
    %2099 = vst.msk [vmem:[#allocation17 + $0x78] sm:$0xff] %vm493, %v2093
    %2100 = vmatprep.subr.mxu0 0.0
    %2101 = vmatpush1.msra.mxu0 0.0
    %2102 = vmatprep.subr.mxu0 0.0
    %2103 = vmatpush1.msra.mxu0 0.0
    %2104 = vmatprep.subr.mxu0 0.0
    %2105 = vmatpush1.msra.mxu0 0.0
    %2106 = vmatprep.subr.mxu0 0.0
    %2107 = vmatpush1.msra.mxu0 0.0
    %2108 = vmatprep.subr.mxu0 0.0
    %2109 = vmatpush1.msra.mxu0 0.0
    %2110 = vmatprep.subr.mxu0 0.0
    %2111 = vmatpush1.msra.mxu0 0.0
    %2112 = vmatprep.subr.mxu0 0.0
    %2113 = vmatpush1.msra.mxu0 0.0
    %2114 = vmatprep.subr.mxu0 0.0
    %2115 = vmatpush1.msra.mxu0 0.0
    %2116 = vmatprep.subr.mxu0 0.0
    %2117 = vmatpush1.msra.mxu0 0.0
    %2118 = vmatprep.subr.mxu0 0.0
    %2119 = vmatpush1.msra.mxu0 0.0
    %2120 = vmatprep.subr.mxu0 0.0
    %2121 = vmatpush1.msra.mxu0 0.0
    %2122 = vmatprep.subr.mxu0 0.0
    %2123 = vmatpush1.msra.mxu0 0.0
    %2124 = vmatprep.subr.mxu0 0.0
    %2125 = vmatpush1.msra.mxu0 %v1450
    %2126 = vmatprep.subr.mxu0 0.0
    %2127 = vmatpush1.msra.mxu0 %v1449
    %2128 = vmatprep.subr.mxu0 0.0
    %2129 = vmatpush1.msra.mxu0 %v1448
    %2130 = vmatprep.subr.mxu0 0.0
    %2131 = vmatpush1.msra.mxu0 %v1447
    %2132 = vmatprep.subr.mxu0 0.0
    %2133 = vmatpush2.msra.mxu0 0.0
    %2134 = vmatprep.subr.mxu0 0.0
    %2135 = vmatpush2.msra.mxu0 0.0
    %2136 = vmatprep.subr.mxu0 0.0
    %2137 = vmatpush2.msra.mxu0 0.0
    %2138 = vmatprep.subr.mxu0 0.0
    %2139 = vmatpush2.msra.mxu0 0.0
    %2140 = vmatprep.subr.mxu0 0.0
    %2141 = vmatpush2.msra.mxu0 0.0
    %2142 = vmatprep.subr.mxu0 0.0
    %2143 = vmatpush2.msra.mxu0 0.0
    %2144 = vmatprep.subr.mxu0 0.0
    %2145 = vmatpush2.msra.mxu0 0.0
    %2146 = vmatprep.subr.mxu0 0.0
    %2147 = vmatpush2.msra.mxu0 0.0
    %2148 = vmatprep.subr.mxu0 0.0
    %2149 = vmatpush2.msra.mxu0 0.0
    %2150 = vmatprep.subr.mxu0 0.0
    %2151 = vmatpush2.msra.mxu0 0.0
    %2152 = vmatprep.subr.mxu0 0.0
    %2153 = vmatpush2.msra.mxu0 0.0
    %2154 = vmatprep.subr.mxu0 0.0
    %2155 = vmatpush2.msra.mxu0 0.0
    %2156 = vmatprep.subr.mxu0 0.0
    %2157 = vmatpush2.msra.mxu0 0.0
    %2158 = vmatprep.subr.mxu0 0.0
    %2159 = vmatpush2.msra.mxu0 0.0
    %2160 = vmatprep.subr.mxu0 0.0
    %2161 = vmatpush2.msra.mxu0 0.0
    %2162 = vmatprep.subr.mxu0 0.0
    %2163 = vmatpush2.msra.mxu0 0.0
    %2164 = vmatprep.mubr.f32.mxu0 0.0
    %2165 = vmatmul.mubr.f32.gmra.mxu0 %v1661
    %v2166 = vpop.f32.mrf.mxu0
    %v2167 = vadd.f32 0.0, %v2166
    %v2168 = vpop.f32.mrf.mxu0
    %2169 = vmatprep.mubr.f32.mxu0 0.0
    %2170 = vmatmul.mubr.f32.gmra.mxu0 %v1664
    %v2171 = vpop.f32.mrf.mxu0
    %v2172 = vadd.f32 0.0, %v2171
    %v2173 = vpop.f32.mrf.mxu0
    %2174 = vmatprep.mubr.f32.mxu0 0.0
    %2175 = vmatmul.mubr.f32.gmra.mxu0 %v1667
    %v2176 = vpop.f32.mrf.mxu0
    %v2177 = vadd.f32 0.0, %v2176
    %v2178 = vpop.f32.mrf.mxu0
    %2179 = vmatprep.mubr.f32.mxu0 0.0
    %2180 = vmatmul.mubr.f32.gmra.mxu0 %v1670
    %v2181 = vpop.f32.mrf.mxu0
    %v2182 = vadd.f32 0.0, %v2181
    %v2183 = vpop.f32.mrf.mxu0
    %2184 = vdwg.mxu0
    %2185 = vst.msk [vmem:[#allocation17 + $0x80] sm:$0xff] %vm493, %v2167
    %2186 = vst.msk [vmem:[#allocation17 + $0x88] sm:$0xff] %vm493, %v2172
    %2187 = vst.msk [vmem:[#allocation17 + $0x90] sm:$0xff] %vm493, %v2177
    %2188 = vst.msk [vmem:[#allocation17 + $0x98] sm:$0xff] %vm493, %v2182
    %v2189 = vld [vmem:[#allocation17] sm:$0xff]
    %v2190 = vld [vmem:[#allocation17 + $0x8] sm:$0xff]
    %v2191 = vld [vmem:[#allocation17 + $0x10] sm:$0xff]
    %v2192 = vld [vmem:[#allocation17 + $0x18] sm:$0xff]
    %v2193 = vld [vmem:[#allocation17 + $0x20] sm:$0xff]
    %v2194 = vld [vmem:[#allocation17 + $0x28] sm:$0xff]
    %v2195 = vld [vmem:[#allocation17 + $0x30] sm:$0xff]
    %v2196 = vld [vmem:[#allocation17 + $0x38] sm:$0xff]
    %v2197 = vld [vmem:[#allocation17 + $0x40] sm:$0xff]
    %v2198 = vld [vmem:[#allocation17 + $0x48] sm:$0xff]
    %v2199 = vld [vmem:[#allocation17 + $0x50] sm:$0xff]
    %v2200 = vld [vmem:[#allocation17 + $0x58] sm:$0xff]
    %v2201 = vld [vmem:[#allocation17 + $0x60] sm:$0xff]
    %v2202 = vld [vmem:[#allocation17 + $0x68] sm:$0xff]
    %v2203 = vld [vmem:[#allocation17 + $0x70] sm:$0xff]
    %v2204 = vld [vmem:[#allocation17 + $0x78] sm:$0xff]
    %v2205 = vld [vmem:[#allocation17 + $0x80] sm:$0xff]
    %v2206 = vld [vmem:[#allocation17 + $0x88] sm:$0xff]
    %v2207 = vld [vmem:[#allocation17 + $0x90] sm:$0xff]
    %v2208 = vld [vmem:[#allocation17 + $0x98] sm:$0xff]
    %v2209 = vld [vmem:[#allocation14] sm:$0xff]
    %v2210 = vld [vmem:[#allocation14 + $0x8] sm:$0xff]
    %v2211 = vld [vmem:[#allocation14 + $0x10] sm:$0xff]
    %v2212 = vld [vmem:[#allocation14 + $0x18] sm:$0xff]
    %v2213 = vld [vmem:[#allocation14 + $0x20] sm:$0xff]
    %v2214 = vld [vmem:[#allocation14 + $0x28] sm:$0xff]
    %v2215 = vld [vmem:[#allocation14 + $0x30] sm:$0xff]
    %v2216 = vld [vmem:[#allocation14 + $0x38] sm:$0xff]
    %v2218 = vsel %vm493, %v2189, 0
    %v2221 = vsel %vm493, %v2190, 0
    %v2224 = vsel %vm493, %v2191, 0
    %v2227 = vsel %vm493, %v2192, 0
    %v2230 = vsel %vm493, %v2193, 0
    %v2233 = vsel %vm493, %v2194, 0
    %v2236 = vsel %vm493, %v2195, 0
    %v2239 = vsel %vm493, %v2196, 0
    %v2242 = vsel %vm493, %v2197, 0
    %v2245 = vsel %vm493, %v2198, 0
    %v2248 = vsel %vm493, %v2199, 0
    %v2251 = vsel %vm493, %v2200, 0
    %v2254 = vsel %vm493, %v2201, 0
    %v2257 = vsel %vm493, %v2202, 0
    %v2260 = vsel %vm493, %v2203, 0
    %v2263 = vsel %vm493, %v2204, 0
    %v2266 = vsel %vm493, %v2205, 0
    %v2269 = vsel %vm493, %v2206, 0
    %v2272 = vsel %vm493, %v2207, 0
    %v2275 = vsel %vm493, %v2208, 0
    %2277 = vmatprep.subr.mxu0 0.0
    %2278 = vmatpush1.msra.mxu0 0.0
    %2279 = vmatprep.subr.mxu0 0.0
    %2280 = vmatpush1.msra.mxu0 0.0
    %2281 = vmatprep.subr.mxu0 0.0
    %2282 = vmatpush1.msra.mxu0 0.0
    %2283 = vmatprep.subr.mxu0 0.0
    %2284 = vmatpush1.msra.mxu0 0.0
    %2285 = vmatprep.subr.mxu0 0.0
    %2286 = vmatpush1.msra.mxu0 0.0
    %2287 = vmatprep.subr.mxu0 0.0
    %2288 = vmatpush1.msra.mxu0 0.0
    %2289 = vmatprep.subr.mxu0 0.0
    %2290 = vmatpush1.msra.mxu0 0.0
    %2291 = vmatprep.subr.mxu0 0.0
    %2292 = vmatpush1.msra.mxu0 0.0
    %2293 = vmatprep.subr.mxu0 0.0
    %2294 = vmatpush1.msra.mxu0 %v2216
    %2295 = vmatprep.subr.mxu0 0.0
    %2296 = vmatpush1.msra.mxu0 %v2215
    %2297 = vmatprep.subr.mxu0 0.0
    %2298 = vmatpush1.msra.mxu0 %v2214
    %2299 = vmatprep.subr.mxu0 0.0
    %2300 = vmatpush1.msra.mxu0 %v2213
    %2301 = vmatprep.subr.mxu0 0.0
    %2302 = vmatpush1.msra.mxu0 %v2212
    %2303 = vmatprep.subr.mxu0 0.0
    %2304 = vmatpush1.msra.mxu0 %v2211
    %2305 = vmatprep.subr.mxu0 0.0
    %2306 = vmatpush1.msra.mxu0 %v2210
    %2307 = vmatprep.subr.mxu0 0.0
    %2308 = vmatpush1.msra.mxu0 %v2209
    %2309 = vmatprep.subr.mxu0 0.0
    %2310 = vmatpush2.msra.mxu0 0.0
    %2311 = vmatprep.subr.mxu0 0.0
    %2312 = vmatpush2.msra.mxu0 0.0
    %2313 = vmatprep.subr.mxu0 0.0
    %2314 = vmatpush2.msra.mxu0 0.0
    %2315 = vmatprep.subr.mxu0 0.0
    %2316 = vmatpush2.msra.mxu0 0.0
    %2317 = vmatprep.subr.mxu0 0.0
    %2318 = vmatpush2.msra.mxu0 0.0
    %2319 = vmatprep.subr.mxu0 0.0
    %2320 = vmatpush2.msra.mxu0 0.0
    %2321 = vmatprep.subr.mxu0 0.0
    %2322 = vmatpush2.msra.mxu0 0.0
    %2323 = vmatprep.subr.mxu0 0.0
    %2324 = vmatpush2.msra.mxu0 0.0
    %2325 = vmatprep.subr.mxu0 0.0
    %2326 = vmatpush2.msra.mxu0 0.0
    %2327 = vmatprep.subr.mxu0 0.0
    %2328 = vmatpush2.msra.mxu0 0.0
    %2329 = vmatprep.subr.mxu0 0.0
    %2330 = vmatpush2.msra.mxu0 0.0
    %2331 = vmatprep.subr.mxu0 0.0
    %2332 = vmatpush2.msra.mxu0 0.0
    %2333 = vmatprep.subr.mxu0 0.0
    %2334 = vmatpush2.msra.mxu0 0.0
    %2335 = vmatprep.subr.mxu0 0.0
    %2336 = vmatpush2.msra.mxu0 0.0
    %2337 = vmatprep.subr.mxu0 0.0
    %2338 = vmatpush2.msra.mxu0 0.0
    %2339 = vmatprep.subr.mxu0 0.0
    %2340 = vmatpush2.msra.mxu0 0.0
    %2341 = vmatprep.mubr.f32.mxu0 0.0
    %2342 = vmatmul.mubr.f32.gmra.mxu0 %v2218
    %v2343 = vpop.f32.mrf.mxu0
    %v2344 = vadd.f32 0.0, %v2343
    %v2345 = vpop.f32.mrf.mxu0
    %2346 = vmatprep.mubr.f32.mxu0 0.0
    %2347 = vmatmul.mubr.f32.gmra.mxu0 %v2221
    %v2348 = vpop.f32.mrf.mxu0
    %v2349 = vadd.f32 0.0, %v2348
    %v2350 = vpop.f32.mrf.mxu0
    %2351 = vmatprep.mubr.f32.mxu0 0.0
    %2352 = vmatmul.mubr.f32.gmra.mxu0 %v2224
    %v2353 = vpop.f32.mrf.mxu0
    %v2354 = vadd.f32 0.0, %v2353
    %v2355 = vpop.f32.mrf.mxu0
    %2356 = vmatprep.mubr.f32.mxu0 0.0
    %2357 = vmatmul.mubr.f32.gmra.mxu0 %v2227
    %v2358 = vpop.f32.mrf.mxu0
    %v2359 = vadd.f32 0.0, %v2358
    %v2360 = vpop.f32.mrf.mxu0
    %2361 = vmatprep.mubr.f32.mxu0 0.0
    %2362 = vmatmul.mubr.f32.gmra.mxu0 %v2230
    %v2363 = vpop.f32.mrf.mxu0
    %v2364 = vadd.f32 0.0, %v2363
    %v2365 = vpop.f32.mrf.mxu0
    %2366 = vmatprep.mubr.f32.mxu0 0.0
    %2367 = vmatmul.mubr.f32.gmra.mxu0 %v2233
    %v2368 = vpop.f32.mrf.mxu0
    %v2369 = vadd.f32 0.0, %v2368
    %v2370 = vpop.f32.mrf.mxu0
    %2371 = vmatprep.mubr.f32.mxu0 0.0
    %2372 = vmatmul.mubr.f32.gmra.mxu0 %v2236
    %v2373 = vpop.f32.mrf.mxu0
    %v2374 = vadd.f32 0.0, %v2373
    %v2375 = vpop.f32.mrf.mxu0
    %2376 = vmatprep.mubr.f32.mxu0 0.0
    %2377 = vmatmul.mubr.f32.gmra.mxu0 %v2239
    %v2378 = vpop.f32.mrf.mxu0
    %v2379 = vadd.f32 0.0, %v2378
    %v2380 = vpop.f32.mrf.mxu0
    %2381 = vmatprep.mubr.f32.mxu0 0.0
    %2382 = vmatmul.mubr.f32.gmra.mxu0 %v2242
    %v2383 = vpop.f32.mrf.mxu0
    %v2384 = vadd.f32 0.0, %v2383
    %v2385 = vpop.f32.mrf.mxu0
    %2386 = vmatprep.mubr.f32.mxu0 0.0
    %2387 = vmatmul.mubr.f32.gmra.mxu0 %v2245
    %v2388 = vpop.f32.mrf.mxu0
    %v2389 = vadd.f32 0.0, %v2388
    %v2390 = vpop.f32.mrf.mxu0
    %2391 = vmatprep.mubr.f32.mxu0 0.0
    %2392 = vmatmul.mubr.f32.gmra.mxu0 %v2248
    %v2393 = vpop.f32.mrf.mxu0
    %v2394 = vadd.f32 0.0, %v2393
    %v2395 = vpop.f32.mrf.mxu0
    %2396 = vmatprep.mubr.f32.mxu0 0.0
    %2397 = vmatmul.mubr.f32.gmra.mxu0 %v2251
    %v2398 = vpop.f32.mrf.mxu0
    %v2399 = vadd.f32 0.0, %v2398
    %v2400 = vpop.f32.mrf.mxu0
    %2401 = vmatprep.mubr.f32.mxu0 0.0
    %2402 = vmatmul.mubr.f32.gmra.mxu0 %v2254
    %v2403 = vpop.f32.mrf.mxu0
    %v2404 = vadd.f32 0.0, %v2403
    %v2405 = vpop.f32.mrf.mxu0
    %2406 = vmatprep.mubr.f32.mxu0 0.0
    %2407 = vmatmul.mubr.f32.gmra.mxu0 %v2257
    %v2408 = vpop.f32.mrf.mxu0
    %v2409 = vadd.f32 0.0, %v2408
    %v2410 = vpop.f32.mrf.mxu0
    %2411 = vmatprep.mubr.f32.mxu0 0.0
    %2412 = vmatmul.mubr.f32.gmra.mxu0 %v2260
    %v2413 = vpop.f32.mrf.mxu0
    %v2414 = vadd.f32 0.0, %v2413
    %v2415 = vpop.f32.mrf.mxu0
    %2416 = vmatprep.mubr.f32.mxu0 0.0
    %2417 = vmatmul.mubr.f32.gmra.mxu0 %v2263
    %v2418 = vpop.f32.mrf.mxu0
    %v2419 = vadd.f32 0.0, %v2418
    %v2420 = vpop.f32.mrf.mxu0
    %2421 = vmatprep.mubr.f32.mxu0 0.0
    %2422 = vmatmul.mubr.f32.gmra.mxu0 %v2266
    %v2423 = vpop.f32.mrf.mxu0
    %v2424 = vadd.f32 0.0, %v2423
    %v2425 = vpop.f32.mrf.mxu0
    %2426 = vmatprep.mubr.f32.mxu0 0.0
    %2427 = vmatmul.mubr.f32.gmra.mxu0 %v2269
    %v2428 = vpop.f32.mrf.mxu0
    %v2429 = vadd.f32 0.0, %v2428
    %v2430 = vpop.f32.mrf.mxu0
    %2431 = vmatprep.mubr.f32.mxu0 0.0
    %2432 = vmatmul.mubr.f32.gmra.mxu0 %v2272
    %v2433 = vpop.f32.mrf.mxu0
    %v2434 = vadd.f32 0.0, %v2433
    %v2435 = vpop.f32.mrf.mxu0
    %2436 = vmatprep.mubr.f32.mxu0 0.0
    %2437 = vmatmul.mubr.f32.gmra.mxu0 %v2275
    %v2438 = vpop.f32.mrf.mxu0
    %v2439 = vadd.f32 0.0, %v2438
    %v2440 = vpop.f32.mrf.mxu0
    %2441 = vdwg.mxu0
    %2442 = vst.msk [vmem:[#allocation17] sm:$0xff] %vm493, %v2344
    %2443 = vst.msk [vmem:[#allocation17 + $0x8] sm:$0xff] %vm493, %v2349
    %2444 = vst.msk [vmem:[#allocation17 + $0x10] sm:$0xff] %vm493, %v2354
    %2445 = vst.msk [vmem:[#allocation17 + $0x18] sm:$0xff] %vm493, %v2359
    %2446 = vst.msk [vmem:[#allocation17 + $0x20] sm:$0xff] %vm493, %v2364
    %2447 = vst.msk [vmem:[#allocation17 + $0x28] sm:$0xff] %vm493, %v2369
    %2448 = vst.msk [vmem:[#allocation17 + $0x30] sm:$0xff] %vm493, %v2374
    %2449 = vst.msk [vmem:[#allocation17 + $0x38] sm:$0xff] %vm493, %v2379
    %2450 = vst.msk [vmem:[#allocation17 + $0x40] sm:$0xff] %vm493, %v2384
    %2451 = vst.msk [vmem:[#allocation17 + $0x48] sm:$0xff] %vm493, %v2389
    %2452 = vst.msk [vmem:[#allocation17 + $0x50] sm:$0xff] %vm493, %v2394
    %2453 = vst.msk [vmem:[#allocation17 + $0x58] sm:$0xff] %vm493, %v2399
    %2454 = vst.msk [vmem:[#allocation17 + $0x60] sm:$0xff] %vm493, %v2404
    %2455 = vst.msk [vmem:[#allocation17 + $0x68] sm:$0xff] %vm493, %v2409
    %2456 = vst.msk [vmem:[#allocation17 + $0x70] sm:$0xff] %vm493, %v2414
    %2457 = vst.msk [vmem:[#allocation17 + $0x78] sm:$0xff] %vm493, %v2419
    %2458 = vst.msk [vmem:[#allocation17 + $0x80] sm:$0xff] %vm493, %v2424
    %2459 = vst.msk [vmem:[#allocation17 + $0x88] sm:$0xff] %vm493, %v2429
    %2460 = vst.msk [vmem:[#allocation17 + $0x90] sm:$0xff] %vm493, %v2434
    %2461 = vst.msk [vmem:[#allocation17 + $0x98] sm:$0xff] %vm493, %v2439
    // Predicated region
    $region66: #{closed_fly_loop_forward.1} parent=1 // pred_check
      _
    $region67: #{closed_fly_loop_forward.1} parent=1 // pred_check_branch
      %2463 = sbr.rel (0) target = $region69
    $region68: #{closed_fly_loop_forward.1} parent=1 // pred_region
      %s2465 = ssub.s32 2560, 2560
      %2466 = vsyncadd [#allocation4], %s2465
      %s2467 = sshll.u32 [#allocation17], 4
      %s2468 = int_to_ptr.vmem [resolvable:$true] %s2467
      %2473 = dma.vmem_to_hbm [thread:$0]  %s2468, 2560, %s8, [#allocation4], 128, 128, 8
    $region69: #{closed_fly_loop_forward.1} parent=1 // pred_fallthru
      _
    // Predicated region
    $region70: #{closed_fly_loop_forward.1} parent=1 // pred_check
      _
    $region71: #{closed_fly_loop_forward.1} parent=1 // pred_check_branch
      %2475 = sbr.rel (0) target = $region73
    $region72: #{closed_fly_loop_forward.1} parent=1 // pred_region
      %2476 = dma.done [#allocation4], 2560
    $region73: #{closed_fly_loop_forward.1} parent=1 // pred_fallthru
      _
    %2477 = vsyncpa [#allocation3], 1
    %2478 = vsyncpa [#allocation10], 1
    %2479 = vsyncpa [#allocation13], 1
    %2480 = vsyncpa [#allocation16], 1
    %2481 = vsyncpa [#allocation4], 1
    %2482 = vsyncpa [#allocation5], 1
    %2483 = vsyncpa [#allocation7], 1

</llo_original>
